<compile_context>
chip_gen: v7x
topology: tpu7x:2x2x1
jax: 0.10.0
libtpu: 0.0.40
codegen_flags: <defaults>
</compile_context>

<pallas_src>
import functools

import jax
import jax.numpy as jnp
from jax.experimental import pallas as pl
from jax.experimental.pallas import tpu as pltpu


def _round_up(v, m):
    return (v + m - 1) // m * m


def _make_kernel(has_ops, has_oh):
    """Build the kernel for a static (has_ops, has_oh) configuration.

    Grid = (M-tiles 'parallel', N-chunks 'arbitrary').  Ref order:
      mask, [x_aug], [one_hot], [w_aug], out, [acc_x scratch]
    """

    def kernel(*refs):
        it = iter(refs)
        mask_ref = next(it)
        x_ref = next(it) if has_ops else None
        oh_ref = next(it) if has_oh else None
        w_ref = next(it) if has_ops else None
        out_ref = next(it)
        accx_ref = next(it) if has_ops else None

        j = pl.program_id(1)
        nj = pl.num_programs(1)

        # 0/1 mask: int8 -> f32 -> bf16 is exact; casting in VMEM keeps the
        # HBM stream at 1 byte/element (mask is the dominant memory stream).
        m = mask_ref[...]
        if m.dtype != jnp.bfloat16:
            m = m.astype(jnp.float32).astype(jnp.bfloat16)

        @pl.when(j == 0)
        def _init():
            out_ref[...] = jnp.zeros_like(out_ref)
            if has_ops:
                accx_ref[...] = jnp.zeros_like(accx_ref)

        if has_oh:
            # 'one-hot' slot: out += mask_tile @ one_hot_chunk   (f32 accumulate)
            out_ref[...] += jnp.dot(m, oh_ref[...],
                                    preferred_element_type=jnp.float32)

        if has_ops:
            # Reordered projection: accumulate mask_tile @ [x | 1] over N chunks.
            accx_ref[...] += jnp.dot(m, x_ref[...],
                                     preferred_element_type=jnp.float32)

            @pl.when(j == nj - 1)
            def _finalize():
                # Single fused projection per M-tile:
                #   out += (mask @ [x | 1]) @ [[W_sum], [b_sum]]
                out_ref[...] += jnp.dot(accx_ref[...].astype(jnp.bfloat16),
                                        w_ref[...],
                                        preferred_element_type=jnp.float32)

    return kernel


def aggr_op(mask, x, w_stack, b_stack, one_hot_h=None, *,
            m_tile=256, n_tile=512, mask_is_binary=True, force_pallas=False):
    """AggrOp forward.

    mask:      (M, N) dense stand-in for the sparse spmm operand (0/1 assumed
               when mask_is_binary=True).
    x:         (N, D_in) node features.
    w_stack:   (K, D_in, D_out), b_stack: (K, D_out) — per-op projection params.
    one_hot_h: (N, D_out) or None — the 'one-hot' op slot contribution.
    Returns (M, D_out) float32.
    """
    M, N = mask.shape
    K = int(w_stack.shape[0])
    has_ops = K > 0
    has_oh = one_hot_h is not None
    if not (has_ops or has_oh):
        raise ValueError("AggrOp needs at least one op or a one-hot slot")

    if has_ops:
        _, D_in, D_out = w_stack.shape
        assert x.shape == (N, D_in)
        assert b_stack.shape == (K, D_out)
    else:
        D_in = x.shape[1]
        D_out = one_hot_h.shape[1]
    if has_oh:
        D_out = one_hot_h.shape[1]
        assert one_hot_h.shape == (N, D_out)

    f32 = jnp.float32
    bf16 = jnp.bfloat16

    # ---- algebraic fold: sum_k (x @ W_k + b_k) == x @ W_sum + b_sum ----------
    if has_ops:
        w_sum = jnp.sum(w_stack, axis=0).astype(f32)            # (D_in, D_out)
        b_sum = jnp.sum(b_stack, axis=0).astype(f32)            # (D_out,)
        w_aug = jnp.concatenate([w_sum, b_sum[None, :]], axis=0)  # (D_in+1, D_out)

    # ---- tiny-problem fallback: pallas_call fixed cost exceeds useful work ---
    if not force_pallas and (M * N * max(D_in, D_out, 1)) < (1 << 21):
        h = one_hot_h.astype(f32) if has_oh else jnp.zeros((N, D_out), f32)
        if has_ops:
            h = h + x.astype(f32) @ w_sum + b_sum
        return (mask.astype(f32) @ h).astype(f32)

    # ---- padding / tiling -----------------------------------------------------
    # Lane-dense feature dims (multiples of 128; bump to 256 for more MXU
    # occupancy on v6e/v7x if the model widths warrant it).
    D_in_p = _round_up(D_in + 1, 128) if has_ops else 128   # +1: bias ones-column
    D_out_p = _round_up(D_out, 128)

    tm = min(_round_up(m_tile, 8), _round_up(M, 8))
    M_p = _round_up(M, tm)
    tn = min(_round_up(n_tile, 128), _round_up(N, 128))
    N_p = _round_up(N, tn)

    # ---- padded operands ------------------------------------------------------
    mask_dtype = jnp.int8 if mask_is_binary else bf16
    mask_p = jnp.zeros((M_p, N_p), mask_dtype).at[:M, :N].set(
        mask.astype(mask_dtype))

    inputs = [mask_p]
    in_specs = [pl.BlockSpec((tm, tn), lambda i, j: (i, j))]

    if has_ops:
        x_p = jnp.zeros((N_p, D_in_p), bf16)
        x_p = x_p.at[:N, :D_in].set(x.astype(bf16))
        x_p = x_p.at[:N, D_in].set(1.0)                         # bias ones-column
        inputs.append(x_p)
        in_specs.append(pl.BlockSpec((tn, D_in_p), lambda i, j: (j, 0)))
    if has_oh:
        oh_p = jnp.zeros((N_p, D_out_p), bf16).at[:N, :D_out].set(
            one_hot_h.astype(bf16))
        inputs.append(oh_p)
        in_specs.append(pl.BlockSpec((tn, D_out_p), lambda i, j: (j, 0)))
    if has_ops:
        w_p = jnp.zeros((D_in_p, D_out_p), bf16).at[:D_in + 1, :D_out].set(
            w_aug.astype(bf16))
        inputs.append(w_p)
        # Grid-invariant block (constant index map) -> fetched once, stays
        # resident; its double-buffer footprint is a few tens of KiB.
        in_specs.append(pl.BlockSpec((D_in_p, D_out_p), lambda i, j: (0, 0)))

    scratch = []
    if has_ops:
        scratch.append(pltpu.VMEM((tm, D_in_p), f32))           # acc_x

    # ---- VMEM budget (double-buffered inputs + resident output + scratch) -----
    est = 2 * tm * tn * mask_p.dtype.itemsize
    est += 2 * tm * D_out_p * 4
    if has_ops:
        est += 2 * tn * D_in_p * 2 + 2 * D_in_p * D_out_p * 2 + tm * D_in_p * 4
    if has_oh:
        est += 2 * tn * D_out_p * 2
    vmem_limit = int(min(max(2 * est + (4 << 20), 32 << 20), 48 << 20))

    grid = (M_p // tm, N_p // tn)

    out = pl.pallas_call(
        _make_kernel(has_ops, has_oh),
        out_shape=jax.ShapeDtypeStruct((M_p, D_out_p), f32),
        grid_spec=pltpu.PrefetchScalarGridSpec(
            num_scalar_prefetch=0,
            grid=grid,
            in_specs=in_specs,
            # Output block index is constant along the N axis -> stays resident
            # in VMEM and acts as the f32 accumulator for the one-hot term.
            out_specs=pl.BlockSpec((tm, D_out_p), lambda i, j: (i, 0)),
            scratch_shapes=scratch,
        ),
        compiler_params=pltpu.CompilerParams(
            dimension_semantics=("parallel", "arbitrary"),
            vmem_limit_bytes=vmem_limit,
        ),
    )(*inputs)

    return out[:M, :D_out]


if __name__ == "__main__":
    # Shapes consistent with the module at a small graph scale:
    #   cluster_op_choice has 3 linear ops + the 'one-hot' slot.
    M = 512          # number of clusters (rows of mask_matrix)
    N = 1024         # number of graph nodes
    D_in = 48        # in_dim
    D_out = 56       # out_dim
    K = 3            # non-one-hot ops

    key = jax.random.PRNGKey(0)
    k_mask, k_x, k_w, k_b, k_oh = jax.random.split(key, 5)

    # Binary sparse-style mask matrix (dense representation).
    mask = (jax.random.uniform(k_mask, (M, N)) > 0.6).astype(jnp.float32)
    x = jax.random.normal(k_x, (N, D_in), dtype=jnp.float32)
    # Deterministic per-op parameters (synthetic init, not a checkpoint).
    w_stack = 0.1 * jax.random.normal(k_w, (K, D_in, D_out), dtype=jnp.float32)
    b_stack = 0.01 * jax.random.normal(k_b, (K, D_out), dtype=jnp.float32)
    # one_hot_h: one-hot node features of width out_dim.
    oh_idx = jax.random.randint(k_oh, (N,), 0, D_out)
    one_hot_h = jax.nn.one_hot(oh_idx, D_out, dtype=jnp.float32)

    out = aggr_op(mask, x, w_stack, b_stack, one_hot_h, force_pallas=True)
    out = jax.block_until_ready(out)
    assert out.shape == (M, D_out)

    # --- Reference 1: same reordered/bf16 math as the kernel (tight check) ----
    bf16 = jnp.bfloat16
    w_sum = jnp.sum(w_stack, axis=0)
    b_sum = jnp.sum(b_stack, axis=0)
    x_aug = jnp.concatenate([x, jnp.ones((N, 1), jnp.float32)], axis=1)
    w_aug = jnp.concatenate([w_sum, b_sum[None, :]], axis=0)
    acc_x = jnp.dot(mask.astype(bf16), x_aug.astype(bf16),
                    preferred_element_type=jnp.float32)
    match = (jnp.dot(mask.astype(bf16), one_hot_h.astype(bf16),
                     preferred_element_type=jnp.float32)
             + jnp.dot(acc_x.astype(bf16), w_aug.astype(bf16),
                       preferred_element_type=jnp.float32))

    # --- Reference 2: pure-f32 original module semantics (loose check) --------
    ref = mask @ one_hot_h
    for k in range(K):
        ref = ref + mask @ (x @ w_stack[k] + b_stack[k])

    def max_rel(a, b):
        return float(jnp.max(jnp.abs(a - b)) / (jnp.max(jnp.abs(b)) + 1e-6))

    assert max_rel(out, match) < 1e-2, "mismatch vs bf16-matched reference"
    assert max_rel(out, ref) < 3e-2, "mismatch vs f32 reference"

    print("KERNEL_OK")
</pallas_src>

<mosaic_0001>
module attributes {stable_mosaic.version = 11 : i64} {
  func.func @kernel(%arg0: i32, %arg1: i32, %arg2: memref<256x512xi8, #tpu.memory_space<vmem>>, %arg3: memref<512x128xbf16, #tpu.memory_space<vmem>>, %arg4: memref<512x128xbf16, #tpu.memory_space<vmem>>, %arg5: memref<128x128xbf16, #tpu.memory_space<vmem>>, %arg6: memref<256x128xf32, #tpu.memory_space<vmem>>, %arg7: memref<256x128xf32, #tpu.memory_space<vmem>>) attributes {dimension_semantics = [#tpu.dimension_semantics<parallel>, #tpu.dimension_semantics<arbitrary>], iteration_bounds = array<i64: 2, 2>, scalar_prefetch = 0 : i64, scratch_operands = 1 : i64, tpu.core_type = #tpu.core_type<tc>, window_params = [{transform_indices = @transform_0, window_bounds = array<i64: 256, 512>}, {transform_indices = @transform_1, window_bounds = array<i64: 512, 128>}, {transform_indices = @transform_2, window_bounds = array<i64: 512, 128>}, {pipeline_mode = #tpu.pipeline_mode<synchronous>, transform_indices = @transform_3, window_bounds = array<i64: 128, 128>}, {transform_indices = @transform_4, window_bounds = array<i64: 256, 128>}]} {
    %c0 = arith.constant 0 : index
    %c0_0 = arith.constant 0 : index
    %0 = vector.load %arg2[%c0, %c0_0] : memref<256x512xi8, #tpu.memory_space<vmem>>, vector<256x512xi8>
    %1 = arith.sitofp %0 : vector<256x512xi8> to vector<256x512xf32>
    %2 = arith.truncf %1 : vector<256x512xf32> to vector<256x512xbf16>
    %c0_i32 = arith.constant 0 : i32
    %3 = arith.cmpi eq, %arg1, %c0_i32 : i32
    %4 = arith.extui %3 : i1 to i32
    %c0_i32_1 = arith.constant 0 : i32
    %5 = arith.cmpi ne, %4, %c0_i32_1 : i32
    scf.if %5 {
      %cst_16 = arith.constant 0.000000e+00 : f32
      %19 = vector.broadcast %cst_16 : f32 to vector<256x128xf32>
      %c0_17 = arith.constant 0 : index
      %c0_18 = arith.constant 0 : index
      %20 = vector.load %arg6[%c0_17, %c0_18] : memref<256x128xf32, #tpu.memory_space<vmem>>, vector<256x128xf32>
      tpu.vector_store %arg6[%c0_17, %c0_18], %19 {strides = array<i32>} : memref<256x128xf32, #tpu.memory_space<vmem>>, vector<256x128xf32>,
      %cst_19 = arith.constant 0.000000e+00 : f32
      %21 = vector.broadcast %cst_19 : f32 to vector<256x128xf32>
      %c0_20 = arith.constant 0 : index
      %c0_21 = arith.constant 0 : index
      %22 = vector.load %arg7[%c0_20, %c0_21] : memref<256x128xf32, #tpu.memory_space<vmem>>, vector<256x128xf32>
      tpu.vector_store %arg7[%c0_20, %c0_21], %21 {strides = array<i32>} : memref<256x128xf32, #tpu.memory_space<vmem>>, vector<256x128xf32>,
    } else {
    }
    %c0_2 = arith.constant 0 : index
    %c0_3 = arith.constant 0 : index
    %6 = vector.load %arg6[%c0_2, %c0_3] : memref<256x128xf32, #tpu.memory_space<vmem>>, vector<256x128xf32>
    %c0_4 = arith.constant 0 : index
    %c0_5 = arith.constant 0 : index
    %7 = vector.load %arg4[%c0_4, %c0_5] : memref<512x128xbf16, #tpu.memory_space<vmem>>, vector<512x128xbf16>
    %cst = arith.constant dense<0.000000e+00> : vector<256x128xf32>
    %8 = tpu.matmul %2, %7, %cst {dimension_numbers = #tpu.dot_dimension_numbers<[1], [0], [0], [1], [0, 0, 1, 1], [], []>} : vector<256x512xbf16>, vector<512x128xbf16>, vector<256x128xf32> -> vector<256x128xf32>
    %9 = arith.addf %6, %8 : vector<256x128xf32>
    %c0_6 = arith.constant 0 : index
    %c0_7 = arith.constant 0 : index
    %10 = vector.load %arg6[%c0_6, %c0_7] : memref<256x128xf32, #tpu.memory_space<vmem>>, vector<256x128xf32>
    tpu.vector_store %arg6[%c0_6, %c0_7], %9 {strides = array<i32>} : memref<256x128xf32, #tpu.memory_space<vmem>>, vector<256x128xf32>,
    %c0_8 = arith.constant 0 : index
    %c0_9 = arith.constant 0 : index
    %11 = vector.load %arg7[%c0_8, %c0_9] : memref<256x128xf32, #tpu.memory_space<vmem>>, vector<256x128xf32>
    %c0_10 = arith.constant 0 : index
    %c0_11 = arith.constant 0 : index
    %12 = vector.load %arg3[%c0_10, %c0_11] : memref<512x128xbf16, #tpu.memory_space<vmem>>, vector<512x128xbf16>
    %cst_12 = arith.constant dense<0.000000e+00> : vector<256x128xf32>
    %13 = tpu.matmul %2, %12, %cst_12 {dimension_numbers = #tpu.dot_dimension_numbers<[1], [0], [0], [1], [0, 0, 1, 1], [], []>} : vector<256x512xbf16>, vector<512x128xbf16>, vector<256x128xf32> -> vector<256x128xf32>
    %14 = arith.addf %11, %13 : vector<256x128xf32>
    %c0_13 = arith.constant 0 : index
    %c0_14 = arith.constant 0 : index
    %15 = vector.load %arg7[%c0_13, %c0_14] : memref<256x128xf32, #tpu.memory_space<vmem>>, vector<256x128xf32>
    tpu.vector_store %arg7[%c0_13, %c0_14], %14 {strides = array<i32>} : memref<256x128xf32, #tpu.memory_space<vmem>>, vector<256x128xf32>,
    %c1_i32 = arith.constant 1 : i32
    %16 = arith.cmpi eq, %arg1, %c1_i32 : i32
    %17 = arith.extui %16 : i1 to i32
    %c0_i32_15 = arith.constant 0 : i32
    %18 = arith.cmpi ne, %17, %c0_i32_15 : i32
    scf.if %18 {
      %c0_16 = arith.constant 0 : index
      %c0_17 = arith.constant 0 : index
      %19 = vector.load %arg6[%c0_16, %c0_17] : memref<256x128xf32, #tpu.memory_space<vmem>>, vector<256x128xf32>
      %c0_18 = arith.constant 0 : index
      %c0_19 = arith.constant 0 : index
      %20 = vector.load %arg7[%c0_18, %c0_19] : memref<256x128xf32, #tpu.memory_space<vmem>>, vector<256x128xf32>
      %21 = arith.truncf %20 : vector<256x128xf32> to vector<256x128xbf16>
      %c0_20 = arith.constant 0 : index
      %c0_21 = arith.constant 0 : index
      %22 = vector.load %arg5[%c0_20, %c0_21] : memref<128x128xbf16, #tpu.memory_space<vmem>>, vector<128x128xbf16>
      %cst_22 = arith.constant dense<0.000000e+00> : vector<256x128xf32>
      %23 = tpu.matmul %21, %22, %cst_22 {dimension_numbers = #tpu.dot_dimension_numbers<[1], [0], [0], [1], [0, 0, 1, 1], [], []>} : vector<256x128xbf16>, vector<128x128xbf16>, vector<256x128xf32> -> vector<256x128xf32>
      %24 = arith.addf %19, %23 : vector<256x128xf32>
      %c0_23 = arith.constant 0 : index
      %c0_24 = arith.constant 0 : index
      %25 = vector.load %arg6[%c0_23, %c0_24] : memref<256x128xf32, #tpu.memory_space<vmem>>, vector<256x128xf32>
      tpu.vector_store %arg6[%c0_23, %c0_24], %24 {strides = array<i32>} : memref<256x128xf32, #tpu.memory_space<vmem>>, vector<256x128xf32>,
    } else {
    }
    return
  }
  func.func @transform_0(%arg0: i32, %arg1: i32) -> (i32, i32) {
    %c0_i32 = arith.constant 0 : i32
    return %arg0, %arg1 : i32, i32
  }
  func.func @transform_1(%arg0: i32, %arg1: i32) -> (i32, i32) {
    %c0_i32 = arith.constant 0 : i32
    %c0_i32_0 = arith.constant 0 : i32
    return %arg1, %c0_i32 : i32, i32
  }
  func.func @transform_2(%arg0: i32, %arg1: i32) -> (i32, i32) {
    %c0_i32 = arith.constant 0 : i32
    %c0_i32_0 = arith.constant 0 : i32
    return %arg1, %c0_i32 : i32, i32
  }
  func.func @transform_3(%arg0: i32, %arg1: i32) -> (i32, i32) {
    %c0_i32 = arith.constant 0 : i32
    %c0_i32_0 = arith.constant 0 : i32
    %c0_i32_1 = arith.constant 0 : i32
    return %c0_i32, %c0_i32_0 : i32, i32
  }
  func.func @transform_4(%arg0: i32, %arg1: i32) -> (i32, i32) {
    %c0_i32 = arith.constant 0 : i32
    %c0_i32_0 = arith.constant 0 : i32
    return %arg0, %c0_i32 : i32, i32
  }
}

</mosaic_0001>

<llo_original>
// kernel: tpu_custom_call.1
$region0: #{tpu_custom_call.1}
  #allocation0 [shape = 'u32[]', space=smem, size = 0x4, offset = 0x4, fixed_abs, tag = 'smem constant byte address 0x4 - core index']
  #allocation1 [shape = 'u32[144,128]{1,0:T(1,128)}', space=vmem, size = 0x12000, scoped, tag = 'internal scratch']
  #allocation2 [shape = 'f32[256,128]{1,0:T(8,128)}', space=vmem, size = 0x20000, scoped, tag = 'scratch operand']
  %s0 = inlined_call_operand.hbm [shape: s8[512,1024], index: 0, kind: input, shape index: {}]
  %s1 = inlined_call_operand.hbm [shape: bf16[1024,128], index: 1, kind: input, shape index: {}]
  %s2 = inlined_call_operand.hbm [shape: bf16[1024,128], index: 2, kind: input, shape index: {}]
  %s3 = inlined_call_operand.hbm [shape: bf16[128,128], index: 3, kind: input, shape index: {}]
  %s4 = inlined_call_operand.hbm [shape: f32[512,128], index: 4, kind: output, shape index: {}]
  %s5 = sld [smem:[#allocation0]]
  $region73: #{tpu_custom_call.1} parent=0
    _
  %s7 = ssub.s32 1, %s5
  %s8 = scalar_select 0, %s7, %s5
  $region1: #{tpu_custom_call.1} parent=0
    #allocation3 [shape = 'u8[262144]{0}', space=vmem, size = 0x40000, scoped, tag = 'input window, operand 0']
    #allocation4 [shape = 's32[2]{0}', space=sflag, size = 0x8, scoped, tag = 'scoped memory for tpu_custom_call.1']
    #allocation5 [shape = 's32[2]{0}', space=sflag, size = 0x8, scoped, tag = 'scoped memory for tpu_custom_call.1']
    #allocation6 [shape = 'u8[262144]{0}', space=vmem, size = 0x40000, scoped, tag = 'input window, operand 1']
    #allocation7 [shape = 's32[2]{0}', space=sflag, size = 0x8, scoped, tag = 'scoped memory for tpu_custom_call.1']
    #allocation8 [shape = 'u8[262144]{0}', space=vmem, size = 0x40000, scoped, tag = 'input window, operand 2']
    #allocation9 [shape = 'u8[32768]{0}', space=vmem, size = 0x8000, scoped, tag = 'input window, operand 3, single buffered']
    #allocation10 [shape = 's32[1]{0}', space=sflag, size = 0x4, scoped, tag = 'scoped memory for tpu_custom_call.1']
    #allocation11 [shape = 'u8[262144]{0}', space=vmem, size = 0x40000, scoped, tag = 'output window, operand 0']
    %9 = vsyncpa [#allocation4], 0
    %s10 = scalar_lea.sflag [#allocation4], 1
    %11 = vsyncpa %s10, 0
    %12 = vsyncpa [#allocation7], 0
    %s13 = scalar_lea.sflag [#allocation7], 1
    %14 = vsyncpa %s13, 0
    %15 = vsyncpa [#allocation10], 0
    %16 = vsyncpa [#allocation5], 0
    %s17 = scalar_lea.sflag [#allocation5], 1
    %18 = vsyncpa %s17, 0
    loop: start=0, step=1, limit=6
    $region2: #{tpu_custom_call.1} parent=1 // loop_pre_header
      _
    $region3: #{tpu_custom_call.1} parent=1 // loop_header
      %s20 = sphi 0, %s24
      %p21 = scmp.ge.s32.totalorder %s20, 6
      %s27 = sphi 0, %s39
      %s28 = sphi 0, %s35
      %s29 = sphi 0, %s27
      %s30 = sphi 0, %s28
      %s31 = sphi 0, %s29
      %s32 = sphi 0, %s30
      %s44 = sphi 0, %s46
      %s47 = sphi 0, %s44
      %s48 = sphi 0, %s47
      %s64 = sphi 0, %s48
      %s70 = sphi 0, %s72
      %s73 = sphi 0, %s70
      %s74 = sphi 0, %s73
      %s90 = sphi 0, %s74
      %s96 = sphi 0, %s98
      %s99 = sphi 0, %s96
      %s100 = sphi 0, %s99
      %s116 = sphi 0, %s100
      %s120 = sphi 0, %s120
      %s122 = sphi 0, %s120
      %s123 = sphi 0, %s122
      %s137 = sphi 0, %s123
      %s143 = sphi 0, %s145
      %s146 = sphi 0, %s143
      %s147 = sphi 0, %s146
      %s163 = sphi 0, %s147
    $region4: #{tpu_custom_call.1} parent=1 // loop_header_branch
      %23 = sbr.rel (%p21) target = $region8
    $region5: #{tpu_custom_call.1} parent=1 // loop_body
      %s25 = ssub.s32 %s20, 1
      %s26 = ssub.s32 %s20, 2
      %s33 = sadd.s32 1, %s28
      %p34 = scmp.ge.s32.totalorder %s33, 2
      %s35 = scalar_select %p34, 0, %s33
      %s36 = sadd.s32 1, %s27
      %s37 = scalar_select %p34, %s36, %s27
      %p38 = scmp.ge.s32.totalorder %s37, 2
      %s39 = scalar_select %p38, 0, %s37
      %s40 = ssub.s32 %s27, %s39
      %s41 = ssub.s32 %s28, %s35
      %s42 = sor.u32 %s40, %s41
      %p43 = scmp.eq.s32.totalorder %s42, 0
      %s45 = sadd.s32 %s44, 1
      %s46 = scalar_select %p43, %s44, %s45
      %p49 = pneg %p43
      %p50 = scmp.eq.s32.totalorder %s20, 3
      %p51 = por %p49, %p50
      %p52 = scmp.ne.s32.totalorder %s44, %s47
      %p53 = scmp.eq.s32.totalorder %s20, 0
      %p54 = por %p52, %p53
      %p55 = scmp.ne.s32.totalorder %s44, %s47
      %p56 = scmp.eq.s32.totalorder %s25, 3
      %p57 = por %p55, %p56
      %p58 = scmp.ne.s32.totalorder %s47, %s48
      %p59 = scmp.eq.s32.totalorder %s25, 0
      %p60 = por %p58, %p59
      %p61 = scmp.ne.s32.totalorder %s47, %s48
      %p62 = scmp.eq.s32.totalorder %s26, 3
      %p63 = por %p61, %p62
      %p65 = scmp.ne.s32.totalorder %s48, %s64
      %p66 = scmp.eq.s32.totalorder %s26, 0
      %p67 = por %p65, %p66
      %s68 = ssub.s32 %s28, %s35
      %p69 = scmp.eq.s32.totalorder %s68, 0
      %s71 = sadd.s32 %s70, 1
      %s72 = scalar_select %p69, %s70, %s71
      %p75 = pneg %p69
      %p76 = scmp.eq.s32.totalorder %s20, 3
      %p77 = por %p75, %p76
      %p78 = scmp.ne.s32.totalorder %s70, %s73
      %p79 = scmp.eq.s32.totalorder %s20, 0
      %p80 = por %p78, %p79
      %p81 = scmp.ne.s32.totalorder %s70, %s73
      %p82 = scmp.eq.s32.totalorder %s25, 3
      %p83 = por %p81, %p82
      %p84 = scmp.ne.s32.totalorder %s73, %s74
      %p85 = scmp.eq.s32.totalorder %s25, 0
      %p86 = por %p84, %p85
      %p87 = scmp.ne.s32.totalorder %s73, %s74
      %p88 = scmp.eq.s32.totalorder %s26, 3
      %p89 = por %p87, %p88
      %p91 = scmp.ne.s32.totalorder %s74, %s90
      %p92 = scmp.eq.s32.totalorder %s26, 0
      %p93 = por %p91, %p92
      %s94 = ssub.s32 %s28, %s35
      %p95 = scmp.eq.s32.totalorder %s94, 0
      %s97 = sadd.s32 %s96, 1
      %s98 = scalar_select %p95, %s96, %s97
      %p101 = pneg %p95
      %p102 = scmp.eq.s32.totalorder %s20, 3
      %p103 = por %p101, %p102
      %p104 = scmp.ne.s32.totalorder %s96, %s99
      %p105 = scmp.eq.s32.totalorder %s20, 0
      %p106 = por %p104, %p105
      %p107 = scmp.ne.s32.totalorder %s96, %s99
      %p108 = scmp.eq.s32.totalorder %s25, 3
      %p109 = por %p107, %p108
      %p110 = scmp.ne.s32.totalorder %s99, %s100
      %p111 = scmp.eq.s32.totalorder %s25, 0
      %p112 = por %p110, %p111
      %p113 = scmp.ne.s32.totalorder %s99, %s100
      %p114 = scmp.eq.s32.totalorder %s26, 3
      %p115 = por %p113, %p114
      %p117 = scmp.ne.s32.totalorder %s100, %s116
      %p118 = scmp.eq.s32.totalorder %s26, 0
      %p119 = por %p117, %p118
      %s121 = sadd.s32 %s120, 1
      %p124 = scmp.eq.s32.totalorder %s20, 3
      %p125 = scmp.ne.s32.totalorder %s120, %s122
      %p126 = scmp.eq.s32.totalorder %s20, 0
      %p127 = por %p125, %p126
      %p128 = scmp.ne.s32.totalorder %s120, %s122
      %p129 = scmp.eq.s32.totalorder %s25, 3
      %p130 = por %p128, %p129
      %p131 = scmp.ne.s32.totalorder %s122, %s123
      %p132 = scmp.eq.s32.totalorder %s25, 0
      %p133 = por %p131, %p132
      %p134 = scmp.ne.s32.totalorder %s122, %s123
      %p135 = scmp.eq.s32.totalorder %s26, 3
      %p136 = por %p134, %p135
      %p138 = scmp.ne.s32.totalorder %s123, %s137
      %p139 = scmp.eq.s32.totalorder %s26, 0
      %p140 = por %p138, %p139
      %s141 = ssub.s32 %s27, %s39
      %p142 = scmp.eq.s32.totalorder %s141, 0
      %s144 = sadd.s32 %s143, 1
      %s145 = scalar_select %p142, %s143, %s144
      %p148 = pneg %p142
      %p149 = scmp.eq.s32.totalorder %s20, 3
      %p150 = por %p148, %p149
      %p151 = scmp.ne.s32.totalorder %s143, %s146
      %p152 = scmp.eq.s32.totalorder %s20, 0
      %p153 = por %p151, %p152
      %p154 = scmp.ne.s32.totalorder %s143, %s146
      %p155 = scmp.eq.s32.totalorder %s25, 3
      %p156 = por %p154, %p155
      %p157 = scmp.ne.s32.totalorder %s146, %s147
      %p158 = scmp.eq.s32.totalorder %s25, 0
      %p159 = por %p157, %p158
      %p160 = scmp.ne.s32.totalorder %s146, %s147
      %p161 = scmp.eq.s32.totalorder %s26, 3
      %p162 = por %p160, %p161
      %p164 = scmp.ne.s32.totalorder %s147, %s163
      %p165 = scmp.eq.s32.totalorder %s26, 0
      %p166 = por %p164, %p165
      %p167 = scmp.le.s32.totalorder 1, %s20
      %p168 = scmp.lt.s32.totalorder %s20, 5
      %p169 = pnand %p167, %p168
      %p170 = pneg %p169
      // Predicated region
      $region9: #{tpu_custom_call.1} parent=5 // pred_check
        _
      $region10: #{tpu_custom_call.1} parent=5 // pred_check_branch
        %172 = sbr.rel (%p169) target = $region12
      $region11: #{tpu_custom_call.1} parent=5 // pred_region
        %s173 = ssub.s32 %s20, 1
        // Predicated region
        $region13: #{tpu_custom_call.1} parent=11 // pred_check
          %p174 = pneg %p133
        $region14: #{tpu_custom_call.1} parent=11 // pred_check_branch
          %176 = sbr.rel (%p174) target = $region16
        $region15: #{tpu_custom_call.1} parent=11 // pred_region
          %s178 = ssub.s32 1024, 1024
          %179 = vsyncadd [#allocation10], %s178
          %s180 = sshll.u32 [#allocation9], 4
          %s181 = int_to_ptr.vmem [resolvable:$true] %s180
          %186 = dma.hbm_to_vmem [thread:$0]  %s3, 1024, %s181, [#allocation10], 64, 64, 4
        $region16: #{tpu_custom_call.1} parent=11 // pred_fallthru
          _
      $region12: #{tpu_custom_call.1} parent=5 // pred_fallthru
        _
      %p187 = scmp.lt.s32.totalorder %s20, 4
      // Predicated region
      $region17: #{tpu_custom_call.1} parent=5 // pred_check
        %p188 = pneg %p187
      $region18: #{tpu_custom_call.1} parent=5 // pred_check_branch
        %190 = sbr.rel (%p188) target = $region20
      $region19: #{tpu_custom_call.1} parent=5 // pred_region
        // Predicated region
        $region21: #{tpu_custom_call.1} parent=19 // pred_check
          %p191 = pneg %p54
        $region22: #{tpu_custom_call.1} parent=19 // pred_check_branch
          %193 = sbr.rel (%p191) target = $region24
        $region23: #{tpu_custom_call.1} parent=19 // pred_region
          %s194 = sand.u32 %s44, 1
          %s195 = scalar_lea.sflag [#allocation4], %s194
          %s196 = sand.u32 %s44, 1
          %s197 = smul.addr %s196, 256
          %s198 = scalar_lea.vmem [#allocation3], %s197
          %s199 = smul.u32 8, %s27
          %s200 = smul.u32 4, %s28
          %s202 = ssub.s32 4096, 4096
          %203 = vsyncadd %s195, %s202
          %s204 = smul.addr %s199, 8
          %s205 = sadd.s32 %s200, %s204
          %s206 = smul.addr %s205, 128
          %s207 = scalar_lea.hbm %s0, %s206
          %s208 = sshll.u32 %s198, 4
          %s209 = int_to_ptr.vmem [resolvable:$true] %s208
          %214 = dma.hbm_to_vmem [thread:$0]  %s207, 4096, %s209, %s195, 1024, 512, 32
        $region24: #{tpu_custom_call.1} parent=19 // pred_fallthru
          _
        // Predicated region
        $region25: #{tpu_custom_call.1} parent=19 // pred_check
          %p215 = pneg %p80
        $region26: #{tpu_custom_call.1} parent=19 // pred_check_branch
          %217 = sbr.rel (%p215) target = $region28
        $region27: #{tpu_custom_call.1} parent=19 // pred_region
          %s218 = sand.u32 %s20, 1
          %s219 = scalar_lea.sflag [#allocation7], %s218
          %s220 = sand.u32 %s70, 1
          %s221 = smul.addr %s220, 256
          %s222 = scalar_lea.vmem [#allocation6], %s221
          %s223 = smul.u32 64, %s28
          %s225 = ssub.s32 4096, 4096
          %226 = vsyncadd %s219, %s225
          %s227 = smul.addr %s223, 64
          %s228 = scalar_lea.hbm %s1, %s227
          %s229 = sshll.u32 %s222, 4
          %s230 = int_to_ptr.vmem [resolvable:$true] %s229
          %235 = dma.hbm_to_vmem [thread:$0]  %s228, 4096, %s230, %s219, 64, 64, 4
        $region28: #{tpu_custom_call.1} parent=19 // pred_fallthru
          _
        // Predicated region
        $region29: #{tpu_custom_call.1} parent=19 // pred_check
          %p236 = pneg %p106
        $region30: #{tpu_custom_call.1} parent=19 // pred_check_branch
          %238 = sbr.rel (%p236) target = $region32
        $region31: #{tpu_custom_call.1} parent=19 // pred_region
          %s239 = sand.u32 %s20, 1
          %s240 = scalar_lea.sflag [#allocation7], %s239
          %s241 = sand.u32 %s96, 1
          %s242 = smul.addr %s241, 256
          %s243 = scalar_lea.vmem [#allocation8], %s242
          %s244 = smul.u32 64, %s28
          %s246 = ssub.s32 4096, 4096
          %247 = vsyncadd %s240, %s246
          %s248 = smul.addr %s244, 64
          %s249 = scalar_lea.hbm %s2, %s248
          %s250 = sshll.u32 %s243, 4
          %s251 = int_to_ptr.vmem [resolvable:$true] %s250
          %256 = dma.hbm_to_vmem [thread:$0]  %s249, 4096, %s251, %s240, 64, 64, 4
        $region32: #{tpu_custom_call.1} parent=19 // pred_fallthru
          _
      $region20: #{tpu_custom_call.1} parent=5 // pred_fallthru
        _
      %p257 = scmp.le.s32.totalorder 1, %s20
      %p258 = scmp.lt.s32.totalorder %s20, 5
      %p259 = pnand %p257, %p258
      %p260 = pneg %p259
      // Predicated region
      $region33: #{tpu_custom_call.1} parent=5 // pred_check
        _
      $region34: #{tpu_custom_call.1} parent=5 // pred_check_branch
        %262 = sbr.rel (%p259) target = $region36
      $region35: #{tpu_custom_call.1} parent=5 // pred_region
        %s263 = ssub.s32 %s20, 1
        %s264 = sand.u32 %s47, 1
        %s265 = scalar_lea.sflag [#allocation4], %s264
        %s266 = sand.u32 %s47, 1
        %s267 = smul.addr %s266, 256
        %s268 = scalar_lea.vmem [#allocation3], %s267
        // Predicated region
        $region37: #{tpu_custom_call.1} parent=35 // pred_check
          %p269 = pneg %p60
        $region38: #{tpu_custom_call.1} parent=35 // pred_check_branch
          %271 = sbr.rel (%p269) target = $region40
        $region39: #{tpu_custom_call.1} parent=35 // pred_region
          %272 = dma.done %s265, 4096
        $region40: #{tpu_custom_call.1} parent=35 // pred_fallthru
          _
        %s273 = sand.u32 %s25, 1
        %s274 = scalar_lea.sflag [#allocation7], %s273
        %s275 = sand.u32 %s73, 1
        %s276 = smul.addr %s275, 256
        %s277 = scalar_lea.vmem [#allocation6], %s276
        // Predicated region
        $region41: #{tpu_custom_call.1} parent=35 // pred_check
          %p278 = pneg %p86
        $region42: #{tpu_custom_call.1} parent=35 // pred_check_branch
          %280 = sbr.rel (%p278) target = $region44
        $region43: #{tpu_custom_call.1} parent=35 // pred_region
          %281 = dma.done %s274, 4096
        $region44: #{tpu_custom_call.1} parent=35 // pred_fallthru
          _
        %s282 = sand.u32 %s25, 1
        %s283 = scalar_lea.sflag [#allocation7], %s282
        %s284 = sand.u32 %s99, 1
        %s285 = smul.addr %s284, 256
        %s286 = scalar_lea.vmem [#allocation8], %s285
        // Predicated region
        $region45: #{tpu_custom_call.1} parent=35 // pred_check
          %p287 = pneg %p112
        $region46: #{tpu_custom_call.1} parent=35 // pred_check_branch
          %289 = sbr.rel (%p287) target = $region48
        $region47: #{tpu_custom_call.1} parent=35 // pred_region
          %290 = dma.done %s283, 4096
        $region48: #{tpu_custom_call.1} parent=35 // pred_fallthru
          _
        // Predicated region
        $region49: #{tpu_custom_call.1} parent=35 // pred_check
          %p291 = pneg %p133
        $region50: #{tpu_custom_call.1} parent=35 // pred_check_branch
          %293 = sbr.rel (%p291) target = $region52
        $region51: #{tpu_custom_call.1} parent=35 // pred_region
          %294 = dma.done [#allocation10], 1024
        $region52: #{tpu_custom_call.1} parent=35 // pred_fallthru
          _
        %s295 = sand.u32 %s47, 1
        %s296 = scalar_lea.sflag [#allocation4], %s295
        %s297 = sand.u32 %s47, 1
        %s298 = smul.addr %s297, 256
        %s299 = scalar_lea.vmem [#allocation3], %s298
        %p300 = pneg %p60
        %p301 = pneg %p57
        %s302 = sand.u32 %s25, 1
        %s303 = scalar_lea.sflag [#allocation7], %s302
        %s304 = sand.u32 %s73, 1
        %s305 = smul.addr %s304, 256
        %s306 = scalar_lea.vmem [#allocation6], %s305
        %p307 = pneg %p86
        %p308 = pneg %p83
        %s309 = sand.u32 %s25, 1
        %s310 = scalar_lea.sflag [#allocation7], %s309
        %s311 = sand.u32 %s99, 1
        %s312 = smul.addr %s311, 256
        %s313 = scalar_lea.vmem [#allocation8], %s312
        %p314 = pneg %p112
        %p315 = pneg %p109
        %p316 = pneg %p133
        %p317 = pneg %p130
        %p318 = pneg %p159
        %p319 = pneg %p156
        %s320 = sand.u32 %s146, 1
        %s321 = scalar_lea.sflag [#allocation5], %s320
        %s322 = sand.u32 %s146, 1
        %s323 = smul.addr %s322, 256
        %s324 = scalar_lea.vmem [#allocation11], %s323
        %s325 = smul.u32 8, %s29
        %s326 = smul.u32 4, %s30
        %s327 = smul.u32 64, %s30
        %s328 = smul.u32 64, %s30
        %s329 = smul.u32 32, %s29
        %v331 = vld [vmem:[%s268] sm:$0xff]
        %v332 = vld [vmem:[%s268 + $0x8] sm:$0xff]
        %v333 = vld [vmem:[%s268 + $0x10] sm:$0xff]
        %v334 = vld [vmem:[%s268 + $0x18] sm:$0xff]
        %v335 = vld [vmem:[%s268 + $0x20] sm:$0xff]
        %v336 = vld [vmem:[%s268 + $0x28] sm:$0xff]
        %v337 = vld [vmem:[%s268 + $0x30] sm:$0xff]
        %v338 = vld [vmem:[%s268 + $0x38] sm:$0xff]
        %v339 = vld [vmem:[%s268 + $0x40] sm:$0xff]
        %v340 = vld [vmem:[%s268 + $0x48] sm:$0xff]
        %v341 = vld [vmem:[%s268 + $0x50] sm:$0xff]
        %v342 = vld [vmem:[%s268 + $0x58] sm:$0xff]
        %v343 = vld [vmem:[%s268 + $0x60] sm:$0xff]
        %v344 = vld [vmem:[%s268 + $0x68] sm:$0xff]
        %v345 = vld [vmem:[%s268 + $0x70] sm:$0xff]
        %v346 = vld [vmem:[%s268 + $0x78] sm:$0xff]
        %v347 = vld [vmem:[%s268 + $0x80] sm:$0xff]
        %v348 = vld [vmem:[%s268 + $0x88] sm:$0xff]
        %v349 = vld [vmem:[%s268 + $0x90] sm:$0xff]
        %v350 = vld [vmem:[%s268 + $0x98] sm:$0xff]
        %v351 = vld [vmem:[%s268 + $0xa0] sm:$0xff]
        %v352 = vld [vmem:[%s268 + $0xa8] sm:$0xff]
        %v353 = vld [vmem:[%s268 + $0xb0] sm:$0xff]
        %v354 = vld [vmem:[%s268 + $0xb8] sm:$0xff]
        %v355 = vld [vmem:[%s268 + $0xc0] sm:$0xff]
        %v356 = vld [vmem:[%s268 + $0xc8] sm:$0xff]
        %v357 = vld [vmem:[%s268 + $0xd0] sm:$0xff]
        %v358 = vld [vmem:[%s268 + $0xd8] sm:$0xff]
        %v359 = vld [vmem:[%s268 + $0xe0] sm:$0xff]
        %v360 = vld [vmem:[%s268 + $0xe8] sm:$0xff]
        %v361 = vld [vmem:[%s268 + $0xf0] sm:$0xff]
        %v362 = vld [vmem:[%s268 + $0xf8] sm:$0xff]
        %v363 = vunpack.c.l.s8.bf16 %v331
        %v364 = vunpack.c.l.s8.bf16 %v332
        %v365 = vunpack.c.l.s8.bf16 %v333
        %v366 = vunpack.c.l.s8.bf16 %v334
        %v367 = vunpack.c.h.s8.bf16 %v331
        %v368 = vunpack.c.h.s8.bf16 %v332
        %v369 = vunpack.c.h.s8.bf16 %v333
        %v370 = vunpack.c.h.s8.bf16 %v334
        %v371 = vunpack.c.l.s8.bf16 %v335
        %v372 = vunpack.c.l.s8.bf16 %v336
        %v373 = vunpack.c.l.s8.bf16 %v337
        %v374 = vunpack.c.l.s8.bf16 %v338
        %v375 = vunpack.c.h.s8.bf16 %v335
        %v376 = vunpack.c.h.s8.bf16 %v336
        %v377 = vunpack.c.h.s8.bf16 %v337
        %v378 = vunpack.c.h.s8.bf16 %v338
        %v379 = vunpack.c.l.s8.bf16 %v339
        %v380 = vunpack.c.l.s8.bf16 %v340
        %v381 = vunpack.c.l.s8.bf16 %v341
        %v382 = vunpack.c.l.s8.bf16 %v342
        %v383 = vunpack.c.h.s8.bf16 %v339
        %v384 = vunpack.c.h.s8.bf16 %v340
        %v385 = vunpack.c.h.s8.bf16 %v341
        %v386 = vunpack.c.h.s8.bf16 %v342
        %v387 = vunpack.c.l.s8.bf16 %v343
        %v388 = vunpack.c.l.s8.bf16 %v344
        %v389 = vunpack.c.l.s8.bf16 %v345
        %v390 = vunpack.c.l.s8.bf16 %v346
        %v391 = vunpack.c.h.s8.bf16 %v343
        %v392 = vunpack.c.h.s8.bf16 %v344
        %v393 = vunpack.c.h.s8.bf16 %v345
        %v394 = vunpack.c.h.s8.bf16 %v346
        %v395 = vunpack.c.l.s8.bf16 %v347
        %v396 = vunpack.c.l.s8.bf16 %v348
        %v397 = vunpack.c.l.s8.bf16 %v349
        %v398 = vunpack.c.l.s8.bf16 %v350
        %v399 = vunpack.c.h.s8.bf16 %v347
        %v400 = vunpack.c.h.s8.bf16 %v348
        %v401 = vunpack.c.h.s8.bf16 %v349
        %v402 = vunpack.c.h.s8.bf16 %v350
        %v403 = vunpack.c.l.s8.bf16 %v351
        %v404 = vunpack.c.l.s8.bf16 %v352
        %v405 = vunpack.c.l.s8.bf16 %v353
        %v406 = vunpack.c.l.s8.bf16 %v354
        %v407 = vunpack.c.h.s8.bf16 %v351
        %v408 = vunpack.c.h.s8.bf16 %v352
        %v409 = vunpack.c.h.s8.bf16 %v353
        %v410 = vunpack.c.h.s8.bf16 %v354
        %v411 = vunpack.c.l.s8.bf16 %v355
        %v412 = vunpack.c.l.s8.bf16 %v356
        %v413 = vunpack.c.l.s8.bf16 %v357
        %v414 = vunpack.c.l.s8.bf16 %v358
        %v415 = vunpack.c.h.s8.bf16 %v355
        %v416 = vunpack.c.h.s8.bf16 %v356
        %v417 = vunpack.c.h.s8.bf16 %v357
        %v418 = vunpack.c.h.s8.bf16 %v358
        %v419 = vunpack.c.l.s8.bf16 %v359
        %v420 = vunpack.c.l.s8.bf16 %v360
        %v421 = vunpack.c.l.s8.bf16 %v361
        %v422 = vunpack.c.l.s8.bf16 %v362
        %v423 = vunpack.c.h.s8.bf16 %v359
        %v424 = vunpack.c.h.s8.bf16 %v360
        %v425 = vunpack.c.h.s8.bf16 %v361
        %v426 = vunpack.c.h.s8.bf16 %v362
        %p427 = scmp.eq.s32.totalorder %s30, 0
        // Predicated region
        $region53: #{tpu_custom_call.1} parent=35 // pred_check
          %p428 = pneg %p427
        $region54: #{tpu_custom_call.1} parent=35 // pred_check_branch
          %430 = sbr.rel (%p428) target = $region56
        $region55: #{tpu_custom_call.1} parent=35 // pred_region
          %431 = vst [vmem:[%s324] sm:$0xff] 0.0
          %432 = vst [vmem:[%s324 + $0x8] sm:$0xff] 0.0
          %433 = vst [vmem:[%s324 + $0x10] sm:$0xff] 0.0
          %434 = vst [vmem:[%s324 + $0x18] sm:$0xff] 0.0
          %435 = vst [vmem:[%s324 + $0x20] sm:$0xff] 0.0
          %436 = vst [vmem:[%s324 + $0x28] sm:$0xff] 0.0
          %437 = vst [vmem:[%s324 + $0x30] sm:$0xff] 0.0
          %438 = vst [vmem:[%s324 + $0x38] sm:$0xff] 0.0
          %439 = vst [vmem:[%s324 + $0x40] sm:$0xff] 0.0
          %440 = vst [vmem:[%s324 + $0x48] sm:$0xff] 0.0
          %441 = vst [vmem:[%s324 + $0x50] sm:$0xff] 0.0
          %442 = vst [vmem:[%s324 + $0x58] sm:$0xff] 0.0
          %443 = vst [vmem:[%s324 + $0x60] sm:$0xff] 0.0
          %444 = vst [vmem:[%s324 + $0x68] sm:$0xff] 0.0
          %445 = vst [vmem:[%s324 + $0x70] sm:$0xff] 0.0
          %446 = vst [vmem:[%s324 + $0x78] sm:$0xff] 0.0
          %447 = vst [vmem:[%s324 + $0x80] sm:$0xff] 0.0
          %448 = vst [vmem:[%s324 + $0x88] sm:$0xff] 0.0
          %449 = vst [vmem:[%s324 + $0x90] sm:$0xff] 0.0
          %450 = vst [vmem:[%s324 + $0x98] sm:$0xff] 0.0
          %451 = vst [vmem:[%s324 + $0xa0] sm:$0xff] 0.0
          %452 = vst [vmem:[%s324 + $0xa8] sm:$0xff] 0.0
          %453 = vst [vmem:[%s324 + $0xb0] sm:$0xff] 0.0
          %454 = vst [vmem:[%s324 + $0xb8] sm:$0xff] 0.0
          %455 = vst [vmem:[%s324 + $0xc0] sm:$0xff] 0.0
          %456 = vst [vmem:[%s324 + $0xc8] sm:$0xff] 0.0
          %457 = vst [vmem:[%s324 + $0xd0] sm:$0xff] 0.0
          %458 = vst [vmem:[%s324 + $0xd8] sm:$0xff] 0.0
          %459 = vst [vmem:[%s324 + $0xe0] sm:$0xff] 0.0
          %460 = vst [vmem:[%s324 + $0xe8] sm:$0xff] 0.0
          %461 = vst [vmem:[%s324 + $0xf0] sm:$0xff] 0.0
          %462 = vst [vmem:[%s324 + $0xf8] sm:$0xff] 0.0
          %463 = vst [vmem:[#allocation2] sm:$0xff] 0.0
          %464 = vst [vmem:[#allocation2 + $0x8] sm:$0xff] 0.0
          %465 = vst [vmem:[#allocation2 + $0x10] sm:$0xff] 0.0
          %466 = vst [vmem:[#allocation2 + $0x18] sm:$0xff] 0.0
          %467 = vst [vmem:[#allocation2 + $0x20] sm:$0xff] 0.0
          %468 = vst [vmem:[#allocation2 + $0x28] sm:$0xff] 0.0
          %469 = vst [vmem:[#allocation2 + $0x30] sm:$0xff] 0.0
          %470 = vst [vmem:[#allocation2 + $0x38] sm:$0xff] 0.0
          %471 = vst [vmem:[#allocation2 + $0x40] sm:$0xff] 0.0
          %472 = vst [vmem:[#allocation2 + $0x48] sm:$0xff] 0.0
          %473 = vst [vmem:[#allocation2 + $0x50] sm:$0xff] 0.0
          %474 = vst [vmem:[#allocation2 + $0x58] sm:$0xff] 0.0
          %475 = vst [vmem:[#allocation2 + $0x60] sm:$0xff] 0.0
          %476 = vst [vmem:[#allocation2 + $0x68] sm:$0xff] 0.0
          %477 = vst [vmem:[#allocation2 + $0x70] sm:$0xff] 0.0
          %478 = vst [vmem:[#allocation2 + $0x78] sm:$0xff] 0.0
          %479 = vst [vmem:[#allocation2 + $0x80] sm:$0xff] 0.0
          %480 = vst [vmem:[#allocation2 + $0x88] sm:$0xff] 0.0
          %481 = vst [vmem:[#allocation2 + $0x90] sm:$0xff] 0.0
          %482 = vst [vmem:[#allocation2 + $0x98] sm:$0xff] 0.0
          %483 = vst [vmem:[#allocation2 + $0xa0] sm:$0xff] 0.0
          %484 = vst [vmem:[#allocation2 + $0xa8] sm:$0xff] 0.0
          %485 = vst [vmem:[#allocation2 + $0xb0] sm:$0xff] 0.0
          %486 = vst [vmem:[#allocation2 + $0xb8] sm:$0xff] 0.0
          %487 = vst [vmem:[#allocation2 + $0xc0] sm:$0xff] 0.0
          %488 = vst [vmem:[#allocation2 + $0xc8] sm:$0xff] 0.0
          %489 = vst [vmem:[#allocation2 + $0xd0] sm:$0xff] 0.0
          %490 = vst [vmem:[#allocation2 + $0xd8] sm:$0xff] 0.0
          %491 = vst [vmem:[#allocation2 + $0xe0] sm:$0xff] 0.0
          %492 = vst [vmem:[#allocation2 + $0xe8] sm:$0xff] 0.0
          %493 = vst [vmem:[#allocation2 + $0xf0] sm:$0xff] 0.0
          %494 = vst [vmem:[#allocation2 + $0xf8] sm:$0xff] 0.0
        $region56: #{tpu_custom_call.1} parent=35 // pred_fallthru
          _
        %v495 = vld [vmem:[%s324] sm:$0xff]
        %v496 = vld [vmem:[%s324 + $0x8] sm:$0xff]
        %v497 = vld [vmem:[%s324 + $0x10] sm:$0xff]
        %v498 = vld [vmem:[%s324 + $0x18] sm:$0xff]
        %v499 = vld [vmem:[%s324 + $0x20] sm:$0xff]
        %v500 = vld [vmem:[%s324 + $0x28] sm:$0xff]
        %v501 = vld [vmem:[%s324 + $0x30] sm:$0xff]
        %v502 = vld [vmem:[%s324 + $0x38] sm:$0xff]
        %v503 = vld [vmem:[%s324 + $0x40] sm:$0xff]
        %v504 = vld [vmem:[%s324 + $0x48] sm:$0xff]
        %v505 = vld [vmem:[%s324 + $0x50] sm:$0xff]
        %v506 = vld [vmem:[%s324 + $0x58] sm:$0xff]
        %v507 = vld [vmem:[%s324 + $0x60] sm:$0xff]
        %v508 = vld [vmem:[%s324 + $0x68] sm:$0xff]
        %v509 = vld [vmem:[%s324 + $0x70] sm:$0xff]
        %v510 = vld [vmem:[%s324 + $0x78] sm:$0xff]
        %v511 = vld [vmem:[%s324 + $0x80] sm:$0xff]
        %v512 = vld [vmem:[%s324 + $0x88] sm:$0xff]
        %v513 = vld [vmem:[%s324 + $0x90] sm:$0xff]
        %v514 = vld [vmem:[%s324 + $0x98] sm:$0xff]
        %v515 = vld [vmem:[%s324 + $0xa0] sm:$0xff]
        %v516 = vld [vmem:[%s324 + $0xa8] sm:$0xff]
        %v517 = vld [vmem:[%s324 + $0xb0] sm:$0xff]
        %v518 = vld [vmem:[%s324 + $0xb8] sm:$0xff]
        %v519 = vld [vmem:[%s324 + $0xc0] sm:$0xff]
        %v520 = vld [vmem:[%s324 + $0xc8] sm:$0xff]
        %v521 = vld [vmem:[%s324 + $0xd0] sm:$0xff]
        %v522 = vld [vmem:[%s324 + $0xd8] sm:$0xff]
        %v523 = vld [vmem:[%s324 + $0xe0] sm:$0xff]
        %v524 = vld [vmem:[%s324 + $0xe8] sm:$0xff]
        %v525 = vld [vmem:[%s324 + $0xf0] sm:$0xff]
        %v526 = vld [vmem:[%s324 + $0xf8] sm:$0xff]
        %v527 = vld [vmem:[%s286] sm:$0xf]
        %v528 = vld [vmem:[%s286 + $0x4] sm:$0xf]
        %v529 = vld [vmem:[%s286 + $0x8] sm:$0xf]
        %v530 = vld [vmem:[%s286 + $0xc] sm:$0xf]
        %v531 = vld [vmem:[%s286 + $0x10] sm:$0xf]
        %v532 = vld [vmem:[%s286 + $0x14] sm:$0xf]
        %v533 = vld [vmem:[%s286 + $0x18] sm:$0xf]
        %v534 = vld [vmem:[%s286 + $0x1c] sm:$0xf]
        %v535 = vld [vmem:[%s286 + $0x20] sm:$0xf]
        %v536 = vld [vmem:[%s286 + $0x24] sm:$0xf]
        %v537 = vld [vmem:[%s286 + $0x28] sm:$0xf]
        %v538 = vld [vmem:[%s286 + $0x2c] sm:$0xf]
        %v539 = vld [vmem:[%s286 + $0x30] sm:$0xf]
        %v540 = vld [vmem:[%s286 + $0x34] sm:$0xf]
        %v541 = vld [vmem:[%s286 + $0x38] sm:$0xf]
        %v542 = vld [vmem:[%s286 + $0x3c] sm:$0xf]
        %v543 = vld [vmem:[%s286 + $0x40] sm:$0xf]
        %v544 = vld [vmem:[%s286 + $0x44] sm:$0xf]
        %v545 = vld [vmem:[%s286 + $0x48] sm:$0xf]
        %v546 = vld [vmem:[%s286 + $0x4c] sm:$0xf]
        %v547 = vld [vmem:[%s286 + $0x50] sm:$0xf]
        %v548 = vld [vmem:[%s286 + $0x54] sm:$0xf]
        %v549 = vld [vmem:[%s286 + $0x58] sm:$0xf]
        %v550 = vld [vmem:[%s286 + $0x5c] sm:$0xf]
        %v551 = vld [vmem:[%s286 + $0x60] sm:$0xf]
        %v552 = vld [vmem:[%s286 + $0x64] sm:$0xf]
        %v553 = vld [vmem:[%s286 + $0x68] sm:$0xf]
        %v554 = vld [vmem:[%s286 + $0x6c] sm:$0xf]
        %v555 = vld [vmem:[%s286 + $0x70] sm:$0xf]
        %v556 = vld [vmem:[%s286 + $0x74] sm:$0xf]
        %v557 = vld [vmem:[%s286 + $0x78] sm:$0xf]
        %v558 = vld [vmem:[%s286 + $0x7c] sm:$0xf]
        %v559 = vld [vmem:[%s286 + $0x80] sm:$0xf]
        %v560 = vld [vmem:[%s286 + $0x84] sm:$0xf]
        %v561 = vld [vmem:[%s286 + $0x88] sm:$0xf]
        %v562 = vld [vmem:[%s286 + $0x8c] sm:$0xf]
        %v563 = vld [vmem:[%s286 + $0x90] sm:$0xf]
        %v564 = vld [vmem:[%s286 + $0x94] sm:$0xf]
        %v565 = vld [vmem:[%s286 + $0x98] sm:$0xf]
        %v566 = vld [vmem:[%s286 + $0x9c] sm:$0xf]
        %v567 = vld [vmem:[%s286 + $0xa0] sm:$0xf]
        %v568 = vld [vmem:[%s286 + $0xa4] sm:$0xf]
        %v569 = vld [vmem:[%s286 + $0xa8] sm:$0xf]
        %v570 = vld [vmem:[%s286 + $0xac] sm:$0xf]
        %v571 = vld [vmem:[%s286 + $0xb0] sm:$0xf]
        %v572 = vld [vmem:[%s286 + $0xb4] sm:$0xf]
        %v573 = vld [vmem:[%s286 + $0xb8] sm:$0xf]
        %v574 = vld [vmem:[%s286 + $0xbc] sm:$0xf]
        %v575 = vld [vmem:[%s286 + $0xc0] sm:$0xf]
        %v576 = vld [vmem:[%s286 + $0xc4] sm:$0xf]
        %v577 = vld [vmem:[%s286 + $0xc8] sm:$0xf]
        %v578 = vld [vmem:[%s286 + $0xcc] sm:$0xf]
        %v579 = vld [vmem:[%s286 + $0xd0] sm:$0xf]
        %v580 = vld [vmem:[%s286 + $0xd4] sm:$0xf]
        %v581 = vld [vmem:[%s286 + $0xd8] sm:$0xf]
        %v582 = vld [vmem:[%s286 + $0xdc] sm:$0xf]
        %v583 = vld [vmem:[%s286 + $0xe0] sm:$0xf]
        %v584 = vld [vmem:[%s286 + $0xe4] sm:$0xf]
        %v585 = vld [vmem:[%s286 + $0xe8] sm:$0xf]
        %v586 = vld [vmem:[%s286 + $0xec] sm:$0xf]
        %v587 = vld [vmem:[%s286 + $0xf0] sm:$0xf]
        %v588 = vld [vmem:[%s286 + $0xf4] sm:$0xf]
        %v589 = vld [vmem:[%s286 + $0xf8] sm:$0xf]
        %v590 = vld [vmem:[%s286 + $0xfc] sm:$0xf]
        %v655 = vunpack.c.l.b16 %v527
        %v656 = vunpack.c.l.b16 %v528
        %v657 = vunpack.c.l.b16 %v529
        %v658 = vunpack.c.l.b16 %v530
        %v659 = vunpack.c.l.b16 %v531
        %v660 = vunpack.c.l.b16 %v532
        %v661 = vunpack.c.l.b16 %v533
        %v662 = vunpack.c.l.b16 %v534
        %v663 = vunpack.c.l.b16 %v535
        %v664 = vunpack.c.l.b16 %v536
        %v665 = vunpack.c.l.b16 %v537
        %v666 = vunpack.c.l.b16 %v538
        %v667 = vunpack.c.l.b16 %v539
        %v668 = vunpack.c.l.b16 %v540
        %v669 = vunpack.c.l.b16 %v541
        %v670 = vunpack.c.l.b16 %v542
        %v671 = vunpack.c.l.b16 %v543
        %v672 = vunpack.c.l.b16 %v544
        %v673 = vunpack.c.l.b16 %v545
        %v674 = vunpack.c.l.b16 %v546
        %v675 = vunpack.c.l.b16 %v547
        %v676 = vunpack.c.l.b16 %v548
        %v677 = vunpack.c.l.b16 %v549
        %v678 = vunpack.c.l.b16 %v550
        %v679 = vunpack.c.l.b16 %v551
        %v680 = vunpack.c.l.b16 %v552
        %v681 = vunpack.c.l.b16 %v553
        %v682 = vunpack.c.l.b16 %v554
        %v683 = vunpack.c.l.b16 %v555
        %v684 = vunpack.c.l.b16 %v556
        %v685 = vunpack.c.l.b16 %v557
        %v686 = vunpack.c.l.b16 %v558
        %v687 = vunpack.c.l.b16 %v559
        %v688 = vunpack.c.l.b16 %v560
        %v689 = vunpack.c.l.b16 %v561
        %v690 = vunpack.c.l.b16 %v562
        %v691 = vunpack.c.l.b16 %v563
        %v692 = vunpack.c.l.b16 %v564
        %v693 = vunpack.c.l.b16 %v565
        %v694 = vunpack.c.l.b16 %v566
        %v695 = vunpack.c.l.b16 %v567
        %v696 = vunpack.c.l.b16 %v568
        %v697 = vunpack.c.l.b16 %v569
        %v698 = vunpack.c.l.b16 %v570
        %v699 = vunpack.c.l.b16 %v571
        %v700 = vunpack.c.l.b16 %v572
        %v701 = vunpack.c.l.b16 %v573
        %v702 = vunpack.c.l.b16 %v574
        %v703 = vunpack.c.l.b16 %v575
        %v704 = vunpack.c.l.b16 %v576
        %v705 = vunpack.c.l.b16 %v577
        %v706 = vunpack.c.l.b16 %v578
        %v707 = vunpack.c.l.b16 %v579
        %v708 = vunpack.c.l.b16 %v580
        %v709 = vunpack.c.l.b16 %v581
        %v710 = vunpack.c.l.b16 %v582
        %v711 = vunpack.c.l.b16 %v583
        %v712 = vunpack.c.l.b16 %v584
        %v713 = vunpack.c.l.b16 %v585
        %v714 = vunpack.c.l.b16 %v586
        %v715 = vunpack.c.l.b16 %v587
        %v716 = vunpack.c.l.b16 %v588
        %v717 = vunpack.c.l.b16 %v589
        %v718 = vunpack.c.l.b16 %v590
        %v719 = vpack.c.b16 %v656, %v655
        %v720 = vpack.c.b16 %v658, %v657
        %v721 = vpack.c.b16 %v660, %v659
        %v722 = vpack.c.b16 %v662, %v661
        %v723 = vpack.c.b16 %v664, %v663
        %v724 = vpack.c.b16 %v666, %v665
        %v725 = vpack.c.b16 %v668, %v667
        %v726 = vpack.c.b16 %v670, %v669
        %v727 = vpack.c.b16 %v672, %v671
        %v728 = vpack.c.b16 %v674, %v673
        %v729 = vpack.c.b16 %v676, %v675
        %v730 = vpack.c.b16 %v678, %v677
        %v731 = vpack.c.b16 %v680, %v679
        %v732 = vpack.c.b16 %v682, %v681
        %v733 = vpack.c.b16 %v684, %v683
        %v734 = vpack.c.b16 %v686, %v685
        %v735 = vpack.c.b16 %v688, %v687
        %v736 = vpack.c.b16 %v690, %v689
        %v737 = vpack.c.b16 %v692, %v691
        %v738 = vpack.c.b16 %v694, %v693
        %v739 = vpack.c.b16 %v696, %v695
        %v740 = vpack.c.b16 %v698, %v697
        %v741 = vpack.c.b16 %v700, %v699
        %v742 = vpack.c.b16 %v702, %v701
        %v743 = vpack.c.b16 %v704, %v703
        %v744 = vpack.c.b16 %v706, %v705
        %v745 = vpack.c.b16 %v708, %v707
        %v746 = vpack.c.b16 %v710, %v709
        %v747 = vpack.c.b16 %v712, %v711
        %v748 = vpack.c.b16 %v714, %v713
        %v749 = vpack.c.b16 %v716, %v715
        %v750 = vpack.c.b16 %v718, %v717
        %783 = vmatprep.subr.bf16.mxu0 0
        %784 = vmatpush1.bf16.msra.mxu0 %v719
        %785 = vmatprep.subr.bf16.mxu0 0
        %786 = vmatpush1.bf16.msra.mxu0 %v720
        %787 = vmatprep.subr.bf16.mxu0 0
        %788 = vmatpush1.bf16.msra.mxu0 %v721
        %789 = vmatprep.subr.bf16.mxu0 0
        %790 = vmatpush1.bf16.msra.mxu0 %v722
        %791 = vmatprep.subr.bf16.mxu0 0
        %792 = vmatpush1.bf16.msra.mxu0 %v723
        %793 = vmatprep.subr.bf16.mxu0 0
        %794 = vmatpush1.bf16.msra.mxu0 %v724
        %795 = vmatprep.subr.bf16.mxu0 0
        %796 = vmatpush1.bf16.msra.mxu0 %v725
        %797 = vmatprep.subr.bf16.mxu0 0
        %798 = vmatpush1.bf16.msra.mxu0 %v726
        %799 = vmatprep.subr.bf16.mxu0 0
        %800 = vmatpush1.bf16.msra.mxu0 %v727
        %801 = vmatprep.subr.bf16.mxu0 0
        %802 = vmatpush1.bf16.msra.mxu0 %v728
        %803 = vmatprep.subr.bf16.mxu0 0
        %804 = vmatpush1.bf16.msra.mxu0 %v729
        %805 = vmatprep.subr.bf16.mxu0 0
        %806 = vmatpush1.bf16.msra.mxu0 %v730
        %807 = vmatprep.subr.bf16.mxu0 0
        %808 = vmatpush1.bf16.msra.mxu0 %v731
        %809 = vmatprep.subr.bf16.mxu0 0
        %810 = vmatpush1.bf16.msra.mxu0 %v732
        %811 = vmatprep.subr.bf16.mxu0 0
        %812 = vmatpush1.bf16.msra.mxu0 %v733
        %813 = vmatprep.subr.bf16.mxu0 0
        %814 = vmatpush1.bf16.msra.mxu0 %v734
        %815 = vmatprep.mubr.bf16.mxu0 %v364
        %816 = vmatmul.mubr.bf16.gmra.mrb[0].mxu0 %v363
        %v817 = vpop.f32.mrb[0].mxu0
        %v818 = vadd.f32 0.0, %v817
        %v819 = vpop.f32.mrb[0].mxu0
        %v820 = vpop.f32.mrb[0].mxu0
        %v821 = vadd.f32 0.0, %v820
        %v822 = vpop.f32.mrb[0].mxu0
        %823 = vmatprep.mubr.bf16.mxu0 %v368
        %824 = vmatmul.mubr.bf16.gmra.mrb[0].mxu0 %v367
        %v825 = vpop.f32.mrb[0].mxu0
        %v826 = vadd.f32 0.0, %v825
        %v827 = vpop.f32.mrb[0].mxu0
        %v828 = vpop.f32.mrb[0].mxu0
        %v829 = vadd.f32 0.0, %v828
        %v830 = vpop.f32.mrb[0].mxu0
        %831 = vmatprep.mubr.bf16.mxu0 %v372
        %832 = vmatmul.mubr.bf16.gmra.mrb[0].mxu0 %v371
        %v833 = vpop.f32.mrb[0].mxu0
        %v834 = vadd.f32 0.0, %v833
        %v835 = vpop.f32.mrb[0].mxu0
        %v836 = vpop.f32.mrb[0].mxu0
        %v837 = vadd.f32 0.0, %v836
        %v838 = vpop.f32.mrb[0].mxu0
        %839 = vmatprep.mubr.bf16.mxu0 %v376
        %840 = vmatmul.mubr.bf16.gmra.mrb[0].mxu0 %v375
        %v841 = vpop.f32.mrb[0].mxu0
        %v842 = vadd.f32 0.0, %v841
        %v843 = vpop.f32.mrb[0].mxu0
        %v844 = vpop.f32.mrb[0].mxu0
        %v845 = vadd.f32 0.0, %v844
        %v846 = vpop.f32.mrb[0].mxu0
        %847 = vmatprep.mubr.bf16.mxu0 %v380
        %848 = vmatmul.mubr.bf16.gmra.mrb[0].mxu0 %v379
        %v849 = vpop.f32.mrb[0].mxu0
        %v850 = vadd.f32 0.0, %v849
        %v851 = vpop.f32.mrb[0].mxu0
        %v852 = vpop.f32.mrb[0].mxu0
        %v853 = vadd.f32 0.0, %v852
        %v854 = vpop.f32.mrb[0].mxu0
        %855 = vmatprep.mubr.bf16.mxu0 %v384
        %856 = vmatmul.mubr.bf16.gmra.mrb[0].mxu0 %v383
        %v857 = vpop.f32.mrb[0].mxu0
        %v858 = vadd.f32 0.0, %v857
        %v859 = vpop.f32.mrb[0].mxu0
        %v860 = vpop.f32.mrb[0].mxu0
        %v861 = vadd.f32 0.0, %v860
        %v862 = vpop.f32.mrb[0].mxu0
        %863 = vmatprep.mubr.bf16.mxu0 %v388
        %864 = vmatmul.mubr.bf16.gmra.mrb[0].mxu0 %v387
        %v865 = vpop.f32.mrb[0].mxu0
        %v866 = vadd.f32 0.0, %v865
        %v867 = vpop.f32.mrb[0].mxu0
        %v868 = vpop.f32.mrb[0].mxu0
        %v869 = vadd.f32 0.0, %v868
        %v870 = vpop.f32.mrb[0].mxu0
        %871 = vmatprep.mubr.bf16.mxu0 %v392
        %872 = vmatmul.mubr.bf16.gmra.mrb[0].mxu0 %v391
        %v873 = vpop.f32.mrb[0].mxu0
        %v874 = vadd.f32 0.0, %v873
        %v875 = vpop.f32.mrb[0].mxu0
        %v876 = vpop.f32.mrb[0].mxu0
        %v877 = vadd.f32 0.0, %v876
        %v878 = vpop.f32.mrb[0].mxu0
        %879 = vmatprep.mubr.bf16.mxu0 %v396
        %880 = vmatmul.mubr.bf16.gmra.mrb[0].mxu0 %v395
        %v881 = vpop.f32.mrb[0].mxu0
        %v882 = vadd.f32 0.0, %v881
        %v883 = vpop.f32.mrb[0].mxu0
        %v884 = vpop.f32.mrb[0].mxu0
        %v885 = vadd.f32 0.0, %v884
        %v886 = vpop.f32.mrb[0].mxu0
        %887 = vmatprep.mubr.bf16.mxu0 %v400
        %888 = vmatmul.mubr.bf16.gmra.mrb[0].mxu0 %v399
        %v889 = vpop.f32.mrb[0].mxu0
        %v890 = vadd.f32 0.0, %v889
        %v891 = vpop.f32.mrb[0].mxu0
        %v892 = vpop.f32.mrb[0].mxu0
        %v893 = vadd.f32 0.0, %v892
        %v894 = vpop.f32.mrb[0].mxu0
        %895 = vmatprep.mubr.bf16.mxu0 %v404
        %896 = vmatmul.mubr.bf16.gmra.mrb[0].mxu0 %v403
        %v897 = vpop.f32.mrb[0].mxu0
        %v898 = vadd.f32 0.0, %v897
        %v899 = vpop.f32.mrb[0].mxu0
        %v900 = vpop.f32.mrb[0].mxu0
        %v901 = vadd.f32 0.0, %v900
        %v902 = vpop.f32.mrb[0].mxu0
        %903 = vmatprep.mubr.bf16.mxu0 %v408
        %904 = vmatmul.mubr.bf16.gmra.mrb[0].mxu0 %v407
        %v905 = vpop.f32.mrb[0].mxu0
        %v906 = vadd.f32 0.0, %v905
        %v907 = vpop.f32.mrb[0].mxu0
        %v908 = vpop.f32.mrb[0].mxu0
        %v909 = vadd.f32 0.0, %v908
        %v910 = vpop.f32.mrb[0].mxu0
        %911 = vmatprep.mubr.bf16.mxu0 %v412
        %912 = vmatmul.mubr.bf16.gmra.mrb[0].mxu0 %v411
        %v913 = vpop.f32.mrb[0].mxu0
        %v914 = vadd.f32 0.0, %v913
        %v915 = vpop.f32.mrb[0].mxu0
        %v916 = vpop.f32.mrb[0].mxu0
        %v917 = vadd.f32 0.0, %v916
        %v918 = vpop.f32.mrb[0].mxu0
        %919 = vmatprep.mubr.bf16.mxu0 %v416
        %920 = vmatmul.mubr.bf16.gmra.mrb[0].mxu0 %v415
        %v921 = vpop.f32.mrb[0].mxu0
        %v922 = vadd.f32 0.0, %v921
        %v923 = vpop.f32.mrb[0].mxu0
        %v924 = vpop.f32.mrb[0].mxu0
        %v925 = vadd.f32 0.0, %v924
        %v926 = vpop.f32.mrb[0].mxu0
        %927 = vmatprep.mubr.bf16.mxu0 %v420
        %928 = vmatmul.mubr.bf16.gmra.mrb[0].mxu0 %v419
        %v929 = vpop.f32.mrb[0].mxu0
        %v930 = vadd.f32 0.0, %v929
        %v931 = vpop.f32.mrb[0].mxu0
        %v932 = vpop.f32.mrb[0].mxu0
        %v933 = vadd.f32 0.0, %v932
        %v934 = vpop.f32.mrb[0].mxu0
        %935 = vmatprep.mubr.bf16.mxu0 %v424
        %936 = vmatmul.mubr.bf16.gmra.mrb[0].mxu0 %v423
        %v937 = vpop.f32.mrb[0].mxu0
        %v938 = vadd.f32 0.0, %v937
        %v939 = vpop.f32.mrb[0].mxu0
        %v940 = vpop.f32.mrb[0].mxu0
        %v941 = vadd.f32 0.0, %v940
        %v942 = vpop.f32.mrb[0].mxu0
        %943 = vdwg.mxu0
        %944 = vmatprep.subr.bf16.mxu0 0
        %945 = vmatpush1.bf16.msra.mxu0 %v735
        %946 = vmatprep.subr.bf16.mxu0 0
        %947 = vmatpush1.bf16.msra.mxu0 %v736
        %948 = vmatprep.subr.bf16.mxu0 0
        %949 = vmatpush1.bf16.msra.mxu0 %v737
        %950 = vmatprep.subr.bf16.mxu0 0
        %951 = vmatpush1.bf16.msra.mxu0 %v738
        %952 = vmatprep.subr.bf16.mxu0 0
        %953 = vmatpush1.bf16.msra.mxu0 %v739
        %954 = vmatprep.subr.bf16.mxu0 0
        %955 = vmatpush1.bf16.msra.mxu0 %v740
        %956 = vmatprep.subr.bf16.mxu0 0
        %957 = vmatpush1.bf16.msra.mxu0 %v741
        %958 = vmatprep.subr.bf16.mxu0 0
        %959 = vmatpush1.bf16.msra.mxu0 %v742
        %960 = vmatprep.subr.bf16.mxu0 0
        %961 = vmatpush1.bf16.msra.mxu0 %v743
        %962 = vmatprep.subr.bf16.mxu0 0
        %963 = vmatpush1.bf16.msra.mxu0 %v744
        %964 = vmatprep.subr.bf16.mxu0 0
        %965 = vmatpush1.bf16.msra.mxu0 %v745
        %966 = vmatprep.subr.bf16.mxu0 0
        %967 = vmatpush1.bf16.msra.mxu0 %v746
        %968 = vmatprep.subr.bf16.mxu0 0
        %969 = vmatpush1.bf16.msra.mxu0 %v747
        %970 = vmatprep.subr.bf16.mxu0 0
        %971 = vmatpush1.bf16.msra.mxu0 %v748
        %972 = vmatprep.subr.bf16.mxu0 0
        %973 = vmatpush1.bf16.msra.mxu0 %v749
        %974 = vmatprep.subr.bf16.mxu0 0
        %975 = vmatpush1.bf16.msra.mxu0 %v750
        %976 = vmatprep.mubr.bf16.mxu0 %v366
        %977 = vmatmul.mubr.bf16.gmra.mrb[0].mxu0 %v365
        %v978 = vpop.f32.mrb[0].mxu0
        %v979 = vadd.f32 %v818, %v978
        %v980 = vpop.f32.mrb[0].mxu0
        %v981 = vpop.f32.mrb[0].mxu0
        %v982 = vadd.f32 %v821, %v981
        %v983 = vpop.f32.mrb[0].mxu0
        %984 = vmatprep.mubr.bf16.mxu0 %v370
        %985 = vmatmul.mubr.bf16.gmra.mrb[0].mxu0 %v369
        %v986 = vpop.f32.mrb[0].mxu0
        %v987 = vadd.f32 %v826, %v986
        %v988 = vpop.f32.mrb[0].mxu0
        %v989 = vpop.f32.mrb[0].mxu0
        %v990 = vadd.f32 %v829, %v989
        %v991 = vpop.f32.mrb[0].mxu0
        %992 = vmatprep.mubr.bf16.mxu0 %v374
        %993 = vmatmul.mubr.bf16.gmra.mrb[0].mxu0 %v373
        %v994 = vpop.f32.mrb[0].mxu0
        %v995 = vadd.f32 %v834, %v994
        %v996 = vpop.f32.mrb[0].mxu0
        %v997 = vpop.f32.mrb[0].mxu0
        %v998 = vadd.f32 %v837, %v997
        %v999 = vpop.f32.mrb[0].mxu0
        %1000 = vmatprep.mubr.bf16.mxu0 %v378
        %1001 = vmatmul.mubr.bf16.gmra.mrb[0].mxu0 %v377
        %v1002 = vpop.f32.mrb[0].mxu0
        %v1003 = vadd.f32 %v842, %v1002
        %v1004 = vpop.f32.mrb[0].mxu0
        %v1005 = vpop.f32.mrb[0].mxu0
        %v1006 = vadd.f32 %v845, %v1005
        %v1007 = vpop.f32.mrb[0].mxu0
        %1008 = vmatprep.mubr.bf16.mxu0 %v382
        %1009 = vmatmul.mubr.bf16.gmra.mrb[0].mxu0 %v381
        %v1010 = vpop.f32.mrb[0].mxu0
        %v1011 = vadd.f32 %v850, %v1010
        %v1012 = vpop.f32.mrb[0].mxu0
        %v1013 = vpop.f32.mrb[0].mxu0
        %v1014 = vadd.f32 %v853, %v1013
        %v1015 = vpop.f32.mrb[0].mxu0
        %1016 = vmatprep.mubr.bf16.mxu0 %v386
        %1017 = vmatmul.mubr.bf16.gmra.mrb[0].mxu0 %v385
        %v1018 = vpop.f32.mrb[0].mxu0
        %v1019 = vadd.f32 %v858, %v1018
        %v1020 = vpop.f32.mrb[0].mxu0
        %v1021 = vpop.f32.mrb[0].mxu0
        %v1022 = vadd.f32 %v861, %v1021
        %v1023 = vpop.f32.mrb[0].mxu0
        %1024 = vmatprep.mubr.bf16.mxu0 %v390
        %1025 = vmatmul.mubr.bf16.gmra.mrb[0].mxu0 %v389
        %v1026 = vpop.f32.mrb[0].mxu0
        %v1027 = vadd.f32 %v866, %v1026
        %v1028 = vpop.f32.mrb[0].mxu0
        %v1029 = vpop.f32.mrb[0].mxu0
        %v1030 = vadd.f32 %v869, %v1029
        %v1031 = vpop.f32.mrb[0].mxu0
        %1032 = vmatprep.mubr.bf16.mxu0 %v394
        %1033 = vmatmul.mubr.bf16.gmra.mrb[0].mxu0 %v393
        %v1034 = vpop.f32.mrb[0].mxu0
        %v1035 = vadd.f32 %v874, %v1034
        %v1036 = vpop.f32.mrb[0].mxu0
        %v1037 = vpop.f32.mrb[0].mxu0
        %v1038 = vadd.f32 %v877, %v1037
        %v1039 = vpop.f32.mrb[0].mxu0
        %1040 = vmatprep.mubr.bf16.mxu0 %v398
        %1041 = vmatmul.mubr.bf16.gmra.mrb[0].mxu0 %v397
        %v1042 = vpop.f32.mrb[0].mxu0
        %v1043 = vadd.f32 %v882, %v1042
        %v1044 = vpop.f32.mrb[0].mxu0
        %v1045 = vpop.f32.mrb[0].mxu0
        %v1046 = vadd.f32 %v885, %v1045
        %v1047 = vpop.f32.mrb[0].mxu0
        %1048 = vmatprep.mubr.bf16.mxu0 %v402
        %1049 = vmatmul.mubr.bf16.gmra.mrb[0].mxu0 %v401
        %v1050 = vpop.f32.mrb[0].mxu0
        %v1051 = vadd.f32 %v890, %v1050
        %v1052 = vpop.f32.mrb[0].mxu0
        %v1053 = vpop.f32.mrb[0].mxu0
        %v1054 = vadd.f32 %v893, %v1053
        %v1055 = vpop.f32.mrb[0].mxu0
        %1056 = vmatprep.mubr.bf16.mxu0 %v406
        %1057 = vmatmul.mubr.bf16.gmra.mrb[0].mxu0 %v405
        %v1058 = vpop.f32.mrb[0].mxu0
        %v1059 = vadd.f32 %v898, %v1058
        %v1060 = vpop.f32.mrb[0].mxu0
        %v1061 = vpop.f32.mrb[0].mxu0
        %v1062 = vadd.f32 %v901, %v1061
        %v1063 = vpop.f32.mrb[0].mxu0
        %1064 = vmatprep.mubr.bf16.mxu0 %v410
        %1065 = vmatmul.mubr.bf16.gmra.mrb[0].mxu0 %v409
        %v1066 = vpop.f32.mrb[0].mxu0
        %v1067 = vadd.f32 %v906, %v1066
        %v1068 = vpop.f32.mrb[0].mxu0
        %v1069 = vpop.f32.mrb[0].mxu0
        %v1070 = vadd.f32 %v909, %v1069
        %v1071 = vpop.f32.mrb[0].mxu0
        %1072 = vmatprep.mubr.bf16.mxu0 %v414
        %1073 = vmatmul.mubr.bf16.gmra.mrb[0].mxu0 %v413
        %v1074 = vpop.f32.mrb[0].mxu0
        %v1075 = vadd.f32 %v914, %v1074
        %v1076 = vpop.f32.mrb[0].mxu0
        %v1077 = vpop.f32.mrb[0].mxu0
        %v1078 = vadd.f32 %v917, %v1077
        %v1079 = vpop.f32.mrb[0].mxu0
        %1080 = vmatprep.mubr.bf16.mxu0 %v418
        %1081 = vmatmul.mubr.bf16.gmra.mrb[0].mxu0 %v417
        %v1082 = vpop.f32.mrb[0].mxu0
        %v1083 = vadd.f32 %v922, %v1082
        %v1084 = vpop.f32.mrb[0].mxu0
        %v1085 = vpop.f32.mrb[0].mxu0
        %v1086 = vadd.f32 %v925, %v1085
        %v1087 = vpop.f32.mrb[0].mxu0
        %1088 = vmatprep.mubr.bf16.mxu0 %v422
        %1089 = vmatmul.mubr.bf16.gmra.mrb[0].mxu0 %v421
        %v1090 = vpop.f32.mrb[0].mxu0
        %v1091 = vadd.f32 %v930, %v1090
        %v1092 = vpop.f32.mrb[0].mxu0
        %v1093 = vpop.f32.mrb[0].mxu0
        %v1094 = vadd.f32 %v933, %v1093
        %v1095 = vpop.f32.mrb[0].mxu0
        %1096 = vmatprep.mubr.bf16.mxu0 %v426
        %1097 = vmatmul.mubr.bf16.gmra.mrb[0].mxu0 %v425
        %v1098 = vpop.f32.mrb[0].mxu0
        %v1099 = vadd.f32 %v938, %v1098
        %v1100 = vpop.f32.mrb[0].mxu0
        %v1101 = vpop.f32.mrb[0].mxu0
        %v1102 = vadd.f32 %v941, %v1101
        %v1103 = vpop.f32.mrb[0].mxu0
        %1104 = vdwg.mxu0
        %v1105 = vadd.f32 %v495, %v979
        %v1106 = vadd.f32 %v496, %v982
        %v1107 = vadd.f32 %v497, %v987
        %v1108 = vadd.f32 %v498, %v990
        %v1109 = vadd.f32 %v499, %v995
        %v1110 = vadd.f32 %v500, %v998
        %v1111 = vadd.f32 %v501, %v1003
        %v1112 = vadd.f32 %v502, %v1006
        %v1113 = vadd.f32 %v503, %v1011
        %v1114 = vadd.f32 %v504, %v1014
        %v1115 = vadd.f32 %v505, %v1019
        %v1116 = vadd.f32 %v506, %v1022
        %v1117 = vadd.f32 %v507, %v1027
        %v1118 = vadd.f32 %v508, %v1030
        %v1119 = vadd.f32 %v509, %v1035
        %v1120 = vadd.f32 %v510, %v1038
        %v1121 = vadd.f32 %v511, %v1043
        %v1122 = vadd.f32 %v512, %v1046
        %v1123 = vadd.f32 %v513, %v1051
        %v1124 = vadd.f32 %v514, %v1054
        %v1125 = vadd.f32 %v515, %v1059
        %v1126 = vadd.f32 %v516, %v1062
        %v1127 = vadd.f32 %v517, %v1067
        %v1128 = vadd.f32 %v518, %v1070
        %v1129 = vadd.f32 %v519, %v1075
        %v1130 = vadd.f32 %v520, %v1078
        %v1131 = vadd.f32 %v521, %v1083
        %v1132 = vadd.f32 %v522, %v1086
        %v1133 = vadd.f32 %v523, %v1091
        %v1134 = vadd.f32 %v524, %v1094
        %v1135 = vadd.f32 %v525, %v1099
        %v1136 = vadd.f32 %v526, %v1102
        %1137 = vst [vmem:[%s324] sm:$0xff] %v1105
        %1138 = vst [vmem:[%s324 + $0x8] sm:$0xff] %v1106
        %1139 = vst [vmem:[%s324 + $0x10] sm:$0xff] %v1107
        %1140 = vst [vmem:[%s324 + $0x18] sm:$0xff] %v1108
        %1141 = vst [vmem:[%s324 + $0x20] sm:$0xff] %v1109
        %1142 = vst [vmem:[%s324 + $0x28] sm:$0xff] %v1110
        %1143 = vst [vmem:[%s324 + $0x30] sm:$0xff] %v1111
        %1144 = vst [vmem:[%s324 + $0x38] sm:$0xff] %v1112
        %1145 = vst [vmem:[%s324 + $0x40] sm:$0xff] %v1113
        %1146 = vst [vmem:[%s324 + $0x48] sm:$0xff] %v1114
        %1147 = vst [vmem:[%s324 + $0x50] sm:$0xff] %v1115
        %1148 = vst [vmem:[%s324 + $0x58] sm:$0xff] %v1116
        %1149 = vst [vmem:[%s324 + $0x60] sm:$0xff] %v1117
        %1150 = vst [vmem:[%s324 + $0x68] sm:$0xff] %v1118
        %1151 = vst [vmem:[%s324 + $0x70] sm:$0xff] %v1119
        %1152 = vst [vmem:[%s324 + $0x78] sm:$0xff] %v1120
        %1153 = vst [vmem:[%s324 + $0x80] sm:$0xff] %v1121
        %1154 = vst [vmem:[%s324 + $0x88] sm:$0xff] %v1122
        %1155 = vst [vmem:[%s324 + $0x90] sm:$0xff] %v1123
        %1156 = vst [vmem:[%s324 + $0x98] sm:$0xff] %v1124
        %1157 = vst [vmem:[%s324 + $0xa0] sm:$0xff] %v1125
        %1158 = vst [vmem:[%s324 + $0xa8] sm:$0xff] %v1126
        %1159 = vst [vmem:[%s324 + $0xb0] sm:$0xff] %v1127
        %1160 = vst [vmem:[%s324 + $0xb8] sm:$0xff] %v1128
        %1161 = vst [vmem:[%s324 + $0xc0] sm:$0xff] %v1129
        %1162 = vst [vmem:[%s324 + $0xc8] sm:$0xff] %v1130
        %1163 = vst [vmem:[%s324 + $0xd0] sm:$0xff] %v1131
        %1164 = vst [vmem:[%s324 + $0xd8] sm:$0xff] %v1132
        %1165 = vst [vmem:[%s324 + $0xe0] sm:$0xff] %v1133
        %1166 = vst [vmem:[%s324 + $0xe8] sm:$0xff] %v1134
        %1167 = vst [vmem:[%s324 + $0xf0] sm:$0xff] %v1135
        %1168 = vst [vmem:[%s324 + $0xf8] sm:$0xff] %v1136
        %v1169 = vld [vmem:[#allocation2] sm:$0xff]
        %v1170 = vld [vmem:[#allocation2 + $0x8] sm:$0xff]
        %v1171 = vld [vmem:[#allocation2 + $0x10] sm:$0xff]
        %v1172 = vld [vmem:[#allocation2 + $0x18] sm:$0xff]
        %v1173 = vld [vmem:[#allocation2 + $0x20] sm:$0xff]
        %v1174 = vld [vmem:[#allocation2 + $0x28] sm:$0xff]
        %v1175 = vld [vmem:[#allocation2 + $0x30] sm:$0xff]
        %v1176 = vld [vmem:[#allocation2 + $0x38] sm:$0xff]
        %v1177 = vld [vmem:[#allocation2 + $0x40] sm:$0xff]
        %v1178 = vld [vmem:[#allocation2 + $0x48] sm:$0xff]
        %v1179 = vld [vmem:[#allocation2 + $0x50] sm:$0xff]
        %v1180 = vld [vmem:[#allocation2 + $0x58] sm:$0xff]
        %v1181 = vld [vmem:[#allocation2 + $0x60] sm:$0xff]
        %v1182 = vld [vmem:[#allocation2 + $0x68] sm:$0xff]
        %v1183 = vld [vmem:[#allocation2 + $0x70] sm:$0xff]
        %v1184 = vld [vmem:[#allocation2 + $0x78] sm:$0xff]
        %v1185 = vld [vmem:[#allocation2 + $0x80] sm:$0xff]
        %v1186 = vld [vmem:[#allocation2 + $0x88] sm:$0xff]
        %v1187 = vld [vmem:[#allocation2 + $0x90] sm:$0xff]
        %v1188 = vld [vmem:[#allocation2 + $0x98] sm:$0xff]
        %v1189 = vld [vmem:[#allocation2 + $0xa0] sm:$0xff]
        %v1190 = vld [vmem:[#allocation2 + $0xa8] sm:$0xff]
        %v1191 = vld [vmem:[#allocation2 + $0xb0] sm:$0xff]
        %v1192 = vld [vmem:[#allocation2 + $0xb8] sm:$0xff]
        %v1193 = vld [vmem:[#allocation2 + $0xc0] sm:$0xff]
        %v1194 = vld [vmem:[#allocation2 + $0xc8] sm:$0xff]
        %v1195 = vld [vmem:[#allocation2 + $0xd0] sm:$0xff]
        %v1196 = vld [vmem:[#allocation2 + $0xd8] sm:$0xff]
        %v1197 = vld [vmem:[#allocation2 + $0xe0] sm:$0xff]
        %v1198 = vld [vmem:[#allocation2 + $0xe8] sm:$0xff]
        %v1199 = vld [vmem:[#allocation2 + $0xf0] sm:$0xff]
        %v1200 = vld [vmem:[#allocation2 + $0xf8] sm:$0xff]
        %v1201 = vld [vmem:[%s277] sm:$0xf]
        %v1202 = vld [vmem:[%s277 + $0x4] sm:$0xf]
        %v1203 = vld [vmem:[%s277 + $0x8] sm:$0xf]
        %v1204 = vld [vmem:[%s277 + $0xc] sm:$0xf]
        %v1205 = vld [vmem:[%s277 + $0x10] sm:$0xf]
        %v1206 = vld [vmem:[%s277 + $0x14] sm:$0xf]
        %v1207 = vld [vmem:[%s277 + $0x18] sm:$0xf]
        %v1208 = vld [vmem:[%s277 + $0x1c] sm:$0xf]
        %v1209 = vld [vmem:[%s277 + $0x20] sm:$0xf]
        %v1210 = vld [vmem:[%s277 + $0x24] sm:$0xf]
        %v1211 = vld [vmem:[%s277 + $0x28] sm:$0xf]
        %v1212 = vld [vmem:[%s277 + $0x2c] sm:$0xf]
        %v1213 = vld [vmem:[%s277 + $0x30] sm:$0xf]
        %v1214 = vld [vmem:[%s277 + $0x34] sm:$0xf]
        %v1215 = vld [vmem:[%s277 + $0x38] sm:$0xf]
        %v1216 = vld [vmem:[%s277 + $0x3c] sm:$0xf]
        %v1217 = vld [vmem:[%s277 + $0x40] sm:$0xf]
        %v1218 = vld [vmem:[%s277 + $0x44] sm:$0xf]
        %v1219 = vld [vmem:[%s277 + $0x48] sm:$0xf]
        %v1220 = vld [vmem:[%s277 + $0x4c] sm:$0xf]
        %v1221 = vld [vmem:[%s277 + $0x50] sm:$0xf]
        %v1222 = vld [vmem:[%s277 + $0x54] sm:$0xf]
        %v1223 = vld [vmem:[%s277 + $0x58] sm:$0xf]
        %v1224 = vld [vmem:[%s277 + $0x5c] sm:$0xf]
        %v1225 = vld [vmem:[%s277 + $0x60] sm:$0xf]
        %v1226 = vld [vmem:[%s277 + $0x64] sm:$0xf]
        %v1227 = vld [vmem:[%s277 + $0x68] sm:$0xf]
        %v1228 = vld [vmem:[%s277 + $0x6c] sm:$0xf]
        %v1229 = vld [vmem:[%s277 + $0x70] sm:$0xf]
        %v1230 = vld [vmem:[%s277 + $0x74] sm:$0xf]
        %v1231 = vld [vmem:[%s277 + $0x78] sm:$0xf]
        %v1232 = vld [vmem:[%s277 + $0x7c] sm:$0xf]
        %v1233 = vld [vmem:[%s277 + $0x80] sm:$0xf]
        %v1234 = vld [vmem:[%s277 + $0x84] sm:$0xf]
        %v1235 = vld [vmem:[%s277 + $0x88] sm:$0xf]
        %v1236 = vld [vmem:[%s277 + $0x8c] sm:$0xf]
        %v1237 = vld [vmem:[%s277 + $0x90] sm:$0xf]
        %v1238 = vld [vmem:[%s277 + $0x94] sm:$0xf]
        %v1239 = vld [vmem:[%s277 + $0x98] sm:$0xf]
        %v1240 = vld [vmem:[%s277 + $0x9c] sm:$0xf]
        %v1241 = vld [vmem:[%s277 + $0xa0] sm:$0xf]
        %v1242 = vld [vmem:[%s277 + $0xa4] sm:$0xf]
        %v1243 = vld [vmem:[%s277 + $0xa8] sm:$0xf]
        %v1244 = vld [vmem:[%s277 + $0xac] sm:$0xf]
        %v1245 = vld [vmem:[%s277 + $0xb0] sm:$0xf]
        %v1246 = vld [vmem:[%s277 + $0xb4] sm:$0xf]
        %v1247 = vld [vmem:[%s277 + $0xb8] sm:$0xf]
        %v1248 = vld [vmem:[%s277 + $0xbc] sm:$0xf]
        %v1249 = vld [vmem:[%s277 + $0xc0] sm:$0xf]
        %v1250 = vld [vmem:[%s277 + $0xc4] sm:$0xf]
        %v1251 = vld [vmem:[%s277 + $0xc8] sm:$0xf]
        %v1252 = vld [vmem:[%s277 + $0xcc] sm:$0xf]
        %v1253 = vld [vmem:[%s277 + $0xd0] sm:$0xf]
        %v1254 = vld [vmem:[%s277 + $0xd4] sm:$0xf]
        %v1255 = vld [vmem:[%s277 + $0xd8] sm:$0xf]
        %v1256 = vld [vmem:[%s277 + $0xdc] sm:$0xf]
        %v1257 = vld [vmem:[%s277 + $0xe0] sm:$0xf]
        %v1258 = vld [vmem:[%s277 + $0xe4] sm:$0xf]
        %v1259 = vld [vmem:[%s277 + $0xe8] sm:$0xf]
        %v1260 = vld [vmem:[%s277 + $0xec] sm:$0xf]
        %v1261 = vld [vmem:[%s277 + $0xf0] sm:$0xf]
        %v1262 = vld [vmem:[%s277 + $0xf4] sm:$0xf]
        %v1263 = vld [vmem:[%s277 + $0xf8] sm:$0xf]
        %v1264 = vld [vmem:[%s277 + $0xfc] sm:$0xf]
        %v1329 = vunpack.c.l.b16 %v1201
        %v1330 = vunpack.c.l.b16 %v1202
        %v1331 = vunpack.c.l.b16 %v1203
        %v1332 = vunpack.c.l.b16 %v1204
        %v1333 = vunpack.c.l.b16 %v1205
        %v1334 = vunpack.c.l.b16 %v1206
        %v1335 = vunpack.c.l.b16 %v1207
        %v1336 = vunpack.c.l.b16 %v1208
        %v1337 = vunpack.c.l.b16 %v1209
        %v1338 = vunpack.c.l.b16 %v1210
        %v1339 = vunpack.c.l.b16 %v1211
        %v1340 = vunpack.c.l.b16 %v1212
        %v1341 = vunpack.c.l.b16 %v1213
        %v1342 = vunpack.c.l.b16 %v1214
        %v1343 = vunpack.c.l.b16 %v1215
        %v1344 = vunpack.c.l.b16 %v1216
        %v1345 = vunpack.c.l.b16 %v1217
        %v1346 = vunpack.c.l.b16 %v1218
        %v1347 = vunpack.c.l.b16 %v1219
        %v1348 = vunpack.c.l.b16 %v1220
        %v1349 = vunpack.c.l.b16 %v1221
        %v1350 = vunpack.c.l.b16 %v1222
        %v1351 = vunpack.c.l.b16 %v1223
        %v1352 = vunpack.c.l.b16 %v1224
        %v1353 = vunpack.c.l.b16 %v1225
        %v1354 = vunpack.c.l.b16 %v1226
        %v1355 = vunpack.c.l.b16 %v1227
        %v1356 = vunpack.c.l.b16 %v1228
        %v1357 = vunpack.c.l.b16 %v1229
        %v1358 = vunpack.c.l.b16 %v1230
        %v1359 = vunpack.c.l.b16 %v1231
        %v1360 = vunpack.c.l.b16 %v1232
        %v1361 = vunpack.c.l.b16 %v1233
        %v1362 = vunpack.c.l.b16 %v1234
        %v1363 = vunpack.c.l.b16 %v1235
        %v1364 = vunpack.c.l.b16 %v1236
        %v1365 = vunpack.c.l.b16 %v1237
        %v1366 = vunpack.c.l.b16 %v1238
        %v1367 = vunpack.c.l.b16 %v1239
        %v1368 = vunpack.c.l.b16 %v1240
        %v1369 = vunpack.c.l.b16 %v1241
        %v1370 = vunpack.c.l.b16 %v1242
        %v1371 = vunpack.c.l.b16 %v1243
        %v1372 = vunpack.c.l.b16 %v1244
        %v1373 = vunpack.c.l.b16 %v1245
        %v1374 = vunpack.c.l.b16 %v1246
        %v1375 = vunpack.c.l.b16 %v1247
        %v1376 = vunpack.c.l.b16 %v1248
        %v1377 = vunpack.c.l.b16 %v1249
        %v1378 = vunpack.c.l.b16 %v1250
        %v1379 = vunpack.c.l.b16 %v1251
        %v1380 = vunpack.c.l.b16 %v1252
        %v1381 = vunpack.c.l.b16 %v1253
        %v1382 = vunpack.c.l.b16 %v1254
        %v1383 = vunpack.c.l.b16 %v1255
        %v1384 = vunpack.c.l.b16 %v1256
        %v1385 = vunpack.c.l.b16 %v1257
        %v1386 = vunpack.c.l.b16 %v1258
        %v1387 = vunpack.c.l.b16 %v1259
        %v1388 = vunpack.c.l.b16 %v1260
        %v1389 = vunpack.c.l.b16 %v1261
        %v1390 = vunpack.c.l.b16 %v1262
        %v1391 = vunpack.c.l.b16 %v1263
        %v1392 = vunpack.c.l.b16 %v1264
        %v1393 = vpack.c.b16 %v1330, %v1329
        %v1394 = vpack.c.b16 %v1332, %v1331
        %v1395 = vpack.c.b16 %v1334, %v1333
        %v1396 = vpack.c.b16 %v1336, %v1335
        %v1397 = vpack.c.b16 %v1338, %v1337
        %v1398 = vpack.c.b16 %v1340, %v1339
        %v1399 = vpack.c.b16 %v1342, %v1341
        %v1400 = vpack.c.b16 %v1344, %v1343
        %v1401 = vpack.c.b16 %v1346, %v1345
        %v1402 = vpack.c.b16 %v1348, %v1347
        %v1403 = vpack.c.b16 %v1350, %v1349
        %v1404 = vpack.c.b16 %v1352, %v1351
        %v1405 = vpack.c.b16 %v1354, %v1353
        %v1406 = vpack.c.b16 %v1356, %v1355
        %v1407 = vpack.c.b16 %v1358, %v1357
        %v1408 = vpack.c.b16 %v1360, %v1359
        %v1409 = vpack.c.b16 %v1362, %v1361
        %v1410 = vpack.c.b16 %v1364, %v1363
        %v1411 = vpack.c.b16 %v1366, %v1365
        %v1412 = vpack.c.b16 %v1368, %v1367
        %v1413 = vpack.c.b16 %v1370, %v1369
        %v1414 = vpack.c.b16 %v1372, %v1371
        %v1415 = vpack.c.b16 %v1374, %v1373
        %v1416 = vpack.c.b16 %v1376, %v1375
        %v1417 = vpack.c.b16 %v1378, %v1377
        %v1418 = vpack.c.b16 %v1380, %v1379
        %v1419 = vpack.c.b16 %v1382, %v1381
        %v1420 = vpack.c.b16 %v1384, %v1383
        %v1421 = vpack.c.b16 %v1386, %v1385
        %v1422 = vpack.c.b16 %v1388, %v1387
        %v1423 = vpack.c.b16 %v1390, %v1389
        %v1424 = vpack.c.b16 %v1392, %v1391
        %1457 = vmatprep.subr.bf16.mxu0 0
        %1458 = vmatpush1.bf16.msra.mxu0 %v1393
        %1459 = vmatprep.subr.bf16.mxu0 0
        %1460 = vmatpush1.bf16.msra.mxu0 %v1394
        %1461 = vmatprep.subr.bf16.mxu0 0
        %1462 = vmatpush1.bf16.msra.mxu0 %v1395
        %1463 = vmatprep.subr.bf16.mxu0 0
        %1464 = vmatpush1.bf16.msra.mxu0 %v1396
        %1465 = vmatprep.subr.bf16.mxu0 0
        %1466 = vmatpush1.bf16.msra.mxu0 %v1397
        %1467 = vmatprep.subr.bf16.mxu0 0
        %1468 = vmatpush1.bf16.msra.mxu0 %v1398
        %1469 = vmatprep.subr.bf16.mxu0 0
        %1470 = vmatpush1.bf16.msra.mxu0 %v1399
        %1471 = vmatprep.subr.bf16.mxu0 0
        %1472 = vmatpush1.bf16.msra.mxu0 %v1400
        %1473 = vmatprep.subr.bf16.mxu0 0
        %1474 = vmatpush1.bf16.msra.mxu0 %v1401
        %1475 = vmatprep.subr.bf16.mxu0 0
        %1476 = vmatpush1.bf16.msra.mxu0 %v1402
        %1477 = vmatprep.subr.bf16.mxu0 0
        %1478 = vmatpush1.bf16.msra.mxu0 %v1403
        %1479 = vmatprep.subr.bf16.mxu0 0
        %1480 = vmatpush1.bf16.msra.mxu0 %v1404
        %1481 = vmatprep.subr.bf16.mxu0 0
        %1482 = vmatpush1.bf16.msra.mxu0 %v1405
        %1483 = vmatprep.subr.bf16.mxu0 0
        %1484 = vmatpush1.bf16.msra.mxu0 %v1406
        %1485 = vmatprep.subr.bf16.mxu0 0
        %1486 = vmatpush1.bf16.msra.mxu0 %v1407
        %1487 = vmatprep.subr.bf16.mxu0 0
        %1488 = vmatpush1.bf16.msra.mxu0 %v1408
        %1489 = vmatprep.mubr.bf16.mxu0 %v364
        %1490 = vmatmul.mubr.bf16.gmra.mrb[0].mxu0 %v363
        %v1491 = vpop.f32.mrb[0].mxu0
        %v1492 = vadd.f32 0.0, %v1491
        %v1493 = vpop.f32.mrb[0].mxu0
        %v1494 = vpop.f32.mrb[0].mxu0
        %v1495 = vadd.f32 0.0, %v1494
        %v1496 = vpop.f32.mrb[0].mxu0
        %1497 = vmatprep.mubr.bf16.mxu0 %v368
        %1498 = vmatmul.mubr.bf16.gmra.mrb[0].mxu0 %v367
        %v1499 = vpop.f32.mrb[0].mxu0
        %v1500 = vadd.f32 0.0, %v1499
        %v1501 = vpop.f32.mrb[0].mxu0
        %v1502 = vpop.f32.mrb[0].mxu0
        %v1503 = vadd.f32 0.0, %v1502
        %v1504 = vpop.f32.mrb[0].mxu0
        %1505 = vmatprep.mubr.bf16.mxu0 %v372
        %1506 = vmatmul.mubr.bf16.gmra.mrb[0].mxu0 %v371
        %v1507 = vpop.f32.mrb[0].mxu0
        %v1508 = vadd.f32 0.0, %v1507
        %v1509 = vpop.f32.mrb[0].mxu0
        %v1510 = vpop.f32.mrb[0].mxu0
        %v1511 = vadd.f32 0.0, %v1510
        %v1512 = vpop.f32.mrb[0].mxu0
        %1513 = vmatprep.mubr.bf16.mxu0 %v376
        %1514 = vmatmul.mubr.bf16.gmra.mrb[0].mxu0 %v375
        %v1515 = vpop.f32.mrb[0].mxu0
        %v1516 = vadd.f32 0.0, %v1515
        %v1517 = vpop.f32.mrb[0].mxu0
        %v1518 = vpop.f32.mrb[0].mxu0
        %v1519 = vadd.f32 0.0, %v1518
        %v1520 = vpop.f32.mrb[0].mxu0
        %1521 = vmatprep.mubr.bf16.mxu0 %v380
        %1522 = vmatmul.mubr.bf16.gmra.mrb[0].mxu0 %v379
        %v1523 = vpop.f32.mrb[0].mxu0
        %v1524 = vadd.f32 0.0, %v1523
        %v1525 = vpop.f32.mrb[0].mxu0
        %v1526 = vpop.f32.mrb[0].mxu0
        %v1527 = vadd.f32 0.0, %v1526
        %v1528 = vpop.f32.mrb[0].mxu0
        %1529 = vmatprep.mubr.bf16.mxu0 %v384
        %1530 = vmatmul.mubr.bf16.gmra.mrb[0].mxu0 %v383
        %v1531 = vpop.f32.mrb[0].mxu0
        %v1532 = vadd.f32 0.0, %v1531
        %v1533 = vpop.f32.mrb[0].mxu0
        %v1534 = vpop.f32.mrb[0].mxu0
        %v1535 = vadd.f32 0.0, %v1534
        %v1536 = vpop.f32.mrb[0].mxu0
        %1537 = vmatprep.mubr.bf16.mxu0 %v388
        %1538 = vmatmul.mubr.bf16.gmra.mrb[0].mxu0 %v387
        %v1539 = vpop.f32.mrb[0].mxu0
        %v1540 = vadd.f32 0.0, %v1539
        %v1541 = vpop.f32.mrb[0].mxu0
        %v1542 = vpop.f32.mrb[0].mxu0
        %v1543 = vadd.f32 0.0, %v1542
        %v1544 = vpop.f32.mrb[0].mxu0
        %1545 = vmatprep.mubr.bf16.mxu0 %v392
        %1546 = vmatmul.mubr.bf16.gmra.mrb[0].mxu0 %v391
        %v1547 = vpop.f32.mrb[0].mxu0
        %v1548 = vadd.f32 0.0, %v1547
        %v1549 = vpop.f32.mrb[0].mxu0
        %v1550 = vpop.f32.mrb[0].mxu0
        %v1551 = vadd.f32 0.0, %v1550
        %v1552 = vpop.f32.mrb[0].mxu0
        %1553 = vmatprep.mubr.bf16.mxu0 %v396
        %1554 = vmatmul.mubr.bf16.gmra.mrb[0].mxu0 %v395
        %v1555 = vpop.f32.mrb[0].mxu0
        %v1556 = vadd.f32 0.0, %v1555
        %v1557 = vpop.f32.mrb[0].mxu0
        %v1558 = vpop.f32.mrb[0].mxu0
        %v1559 = vadd.f32 0.0, %v1558
        %v1560 = vpop.f32.mrb[0].mxu0
        %1561 = vmatprep.mubr.bf16.mxu0 %v400
        %1562 = vmatmul.mubr.bf16.gmra.mrb[0].mxu0 %v399
        %v1563 = vpop.f32.mrb[0].mxu0
        %v1564 = vadd.f32 0.0, %v1563
        %v1565 = vpop.f32.mrb[0].mxu0
        %v1566 = vpop.f32.mrb[0].mxu0
        %v1567 = vadd.f32 0.0, %v1566
        %v1568 = vpop.f32.mrb[0].mxu0
        %1569 = vmatprep.mubr.bf16.mxu0 %v404
        %1570 = vmatmul.mubr.bf16.gmra.mrb[0].mxu0 %v403
        %v1571 = vpop.f32.mrb[0].mxu0
        %v1572 = vadd.f32 0.0, %v1571
        %v1573 = vpop.f32.mrb[0].mxu0
        %v1574 = vpop.f32.mrb[0].mxu0
        %v1575 = vadd.f32 0.0, %v1574
        %v1576 = vpop.f32.mrb[0].mxu0
        %1577 = vmatprep.mubr.bf16.mxu0 %v408
        %1578 = vmatmul.mubr.bf16.gmra.mrb[0].mxu0 %v407
        %v1579 = vpop.f32.mrb[0].mxu0
        %v1580 = vadd.f32 0.0, %v1579
        %v1581 = vpop.f32.mrb[0].mxu0
        %v1582 = vpop.f32.mrb[0].mxu0
        %v1583 = vadd.f32 0.0, %v1582
        %v1584 = vpop.f32.mrb[0].mxu0
        %1585 = vmatprep.mubr.bf16.mxu0 %v412
        %1586 = vmatmul.mubr.bf16.gmra.mrb[0].mxu0 %v411
        %v1587 = vpop.f32.mrb[0].mxu0
        %v1588 = vadd.f32 0.0, %v1587
        %v1589 = vpop.f32.mrb[0].mxu0
        %v1590 = vpop.f32.mrb[0].mxu0
        %v1591 = vadd.f32 0.0, %v1590
        %v1592 = vpop.f32.mrb[0].mxu0
        %1593 = vmatprep.mubr.bf16.mxu0 %v416
        %1594 = vmatmul.mubr.bf16.gmra.mrb[0].mxu0 %v415
        %v1595 = vpop.f32.mrb[0].mxu0
        %v1596 = vadd.f32 0.0, %v1595
        %v1597 = vpop.f32.mrb[0].mxu0
        %v1598 = vpop.f32.mrb[0].mxu0
        %v1599 = vadd.f32 0.0, %v1598
        %v1600 = vpop.f32.mrb[0].mxu0
        %1601 = vmatprep.mubr.bf16.mxu0 %v420
        %1602 = vmatmul.mubr.bf16.gmra.mrb[0].mxu0 %v419
        %v1603 = vpop.f32.mrb[0].mxu0
        %v1604 = vadd.f32 0.0, %v1603
        %v1605 = vpop.f32.mrb[0].mxu0
        %v1606 = vpop.f32.mrb[0].mxu0
        %v1607 = vadd.f32 0.0, %v1606
        %v1608 = vpop.f32.mrb[0].mxu0
        %1609 = vmatprep.mubr.bf16.mxu0 %v424
        %1610 = vmatmul.mubr.bf16.gmra.mrb[0].mxu0 %v423
        %v1611 = vpop.f32.mrb[0].mxu0
        %v1612 = vadd.f32 0.0, %v1611
        %v1613 = vpop.f32.mrb[0].mxu0
        %v1614 = vpop.f32.mrb[0].mxu0
        %v1615 = vadd.f32 0.0, %v1614
        %v1616 = vpop.f32.mrb[0].mxu0
        %1617 = vdwg.mxu0
        %1618 = vmatprep.subr.bf16.mxu0 0
        %1619 = vmatpush1.bf16.msra.mxu0 %v1409
        %1620 = vmatprep.subr.bf16.mxu0 0
        %1621 = vmatpush1.bf16.msra.mxu0 %v1410
        %1622 = vmatprep.subr.bf16.mxu0 0
        %1623 = vmatpush1.bf16.msra.mxu0 %v1411
        %1624 = vmatprep.subr.bf16.mxu0 0
        %1625 = vmatpush1.bf16.msra.mxu0 %v1412
        %1626 = vmatprep.subr.bf16.mxu0 0
        %1627 = vmatpush1.bf16.msra.mxu0 %v1413
        %1628 = vmatprep.subr.bf16.mxu0 0
        %1629 = vmatpush1.bf16.msra.mxu0 %v1414
        %1630 = vmatprep.subr.bf16.mxu0 0
        %1631 = vmatpush1.bf16.msra.mxu0 %v1415
        %1632 = vmatprep.subr.bf16.mxu0 0
        %1633 = vmatpush1.bf16.msra.mxu0 %v1416
        %1634 = vmatprep.subr.bf16.mxu0 0
        %1635 = vmatpush1.bf16.msra.mxu0 %v1417
        %1636 = vmatprep.subr.bf16.mxu0 0
        %1637 = vmatpush1.bf16.msra.mxu0 %v1418
        %1638 = vmatprep.subr.bf16.mxu0 0
        %1639 = vmatpush1.bf16.msra.mxu0 %v1419
        %1640 = vmatprep.subr.bf16.mxu0 0
        %1641 = vmatpush1.bf16.msra.mxu0 %v1420
        %1642 = vmatprep.subr.bf16.mxu0 0
        %1643 = vmatpush1.bf16.msra.mxu0 %v1421
        %1644 = vmatprep.subr.bf16.mxu0 0
        %1645 = vmatpush1.bf16.msra.mxu0 %v1422
        %1646 = vmatprep.subr.bf16.mxu0 0
        %1647 = vmatpush1.bf16.msra.mxu0 %v1423
        %1648 = vmatprep.subr.bf16.mxu0 0
        %1649 = vmatpush1.bf16.msra.mxu0 %v1424
        %1650 = vmatprep.mubr.bf16.mxu0 %v366
        %1651 = vmatmul.mubr.bf16.gmra.mrb[0].mxu0 %v365
        %v1652 = vpop.f32.mrb[0].mxu0
        %v1653 = vadd.f32 %v1492, %v1652
        %v1654 = vpop.f32.mrb[0].mxu0
        %v1655 = vpop.f32.mrb[0].mxu0
        %v1656 = vadd.f32 %v1495, %v1655
        %v1657 = vpop.f32.mrb[0].mxu0
        %1658 = vmatprep.mubr.bf16.mxu0 %v370
        %1659 = vmatmul.mubr.bf16.gmra.mrb[0].mxu0 %v369
        %v1660 = vpop.f32.mrb[0].mxu0
        %v1661 = vadd.f32 %v1500, %v1660
        %v1662 = vpop.f32.mrb[0].mxu0
        %v1663 = vpop.f32.mrb[0].mxu0
        %v1664 = vadd.f32 %v1503, %v1663
        %v1665 = vpop.f32.mrb[0].mxu0
        %1666 = vmatprep.mubr.bf16.mxu0 %v374
        %1667 = vmatmul.mubr.bf16.gmra.mrb[0].mxu0 %v373
        %v1668 = vpop.f32.mrb[0].mxu0
        %v1669 = vadd.f32 %v1508, %v1668
        %v1670 = vpop.f32.mrb[0].mxu0
        %v1671 = vpop.f32.mrb[0].mxu0
        %v1672 = vadd.f32 %v1511, %v1671
        %v1673 = vpop.f32.mrb[0].mxu0
        %1674 = vmatprep.mubr.bf16.mxu0 %v378
        %1675 = vmatmul.mubr.bf16.gmra.mrb[0].mxu0 %v377
        %v1676 = vpop.f32.mrb[0].mxu0
        %v1677 = vadd.f32 %v1516, %v1676
        %v1678 = vpop.f32.mrb[0].mxu0
        %v1679 = vpop.f32.mrb[0].mxu0
        %v1680 = vadd.f32 %v1519, %v1679
        %v1681 = vpop.f32.mrb[0].mxu0
        %1682 = vmatprep.mubr.bf16.mxu0 %v382
        %1683 = vmatmul.mubr.bf16.gmra.mrb[0].mxu0 %v381
        %v1684 = vpop.f32.mrb[0].mxu0
        %v1685 = vadd.f32 %v1524, %v1684
        %v1686 = vpop.f32.mrb[0].mxu0
        %v1687 = vpop.f32.mrb[0].mxu0
        %v1688 = vadd.f32 %v1527, %v1687
        %v1689 = vpop.f32.mrb[0].mxu0
        %1690 = vmatprep.mubr.bf16.mxu0 %v386
        %1691 = vmatmul.mubr.bf16.gmra.mrb[0].mxu0 %v385
        %v1692 = vpop.f32.mrb[0].mxu0
        %v1693 = vadd.f32 %v1532, %v1692
        %v1694 = vpop.f32.mrb[0].mxu0
        %v1695 = vpop.f32.mrb[0].mxu0
        %v1696 = vadd.f32 %v1535, %v1695
        %v1697 = vpop.f32.mrb[0].mxu0
        %1698 = vmatprep.mubr.bf16.mxu0 %v390
        %1699 = vmatmul.mubr.bf16.gmra.mrb[0].mxu0 %v389
        %v1700 = vpop.f32.mrb[0].mxu0
        %v1701 = vadd.f32 %v1540, %v1700
        %v1702 = vpop.f32.mrb[0].mxu0
        %v1703 = vpop.f32.mrb[0].mxu0
        %v1704 = vadd.f32 %v1543, %v1703
        %v1705 = vpop.f32.mrb[0].mxu0
        %1706 = vmatprep.mubr.bf16.mxu0 %v394
        %1707 = vmatmul.mubr.bf16.gmra.mrb[0].mxu0 %v393
        %v1708 = vpop.f32.mrb[0].mxu0
        %v1709 = vadd.f32 %v1548, %v1708
        %v1710 = vpop.f32.mrb[0].mxu0
        %v1711 = vpop.f32.mrb[0].mxu0
        %v1712 = vadd.f32 %v1551, %v1711
        %v1713 = vpop.f32.mrb[0].mxu0
        %1714 = vmatprep.mubr.bf16.mxu0 %v398
        %1715 = vmatmul.mubr.bf16.gmra.mrb[0].mxu0 %v397
        %v1716 = vpop.f32.mrb[0].mxu0
        %v1717 = vadd.f32 %v1556, %v1716
        %v1718 = vpop.f32.mrb[0].mxu0
        %v1719 = vpop.f32.mrb[0].mxu0
        %v1720 = vadd.f32 %v1559, %v1719
        %v1721 = vpop.f32.mrb[0].mxu0
        %1722 = vmatprep.mubr.bf16.mxu0 %v402
        %1723 = vmatmul.mubr.bf16.gmra.mrb[0].mxu0 %v401
        %v1724 = vpop.f32.mrb[0].mxu0
        %v1725 = vadd.f32 %v1564, %v1724
        %v1726 = vpop.f32.mrb[0].mxu0
        %v1727 = vpop.f32.mrb[0].mxu0
        %v1728 = vadd.f32 %v1567, %v1727
        %v1729 = vpop.f32.mrb[0].mxu0
        %1730 = vmatprep.mubr.bf16.mxu0 %v406
        %1731 = vmatmul.mubr.bf16.gmra.mrb[0].mxu0 %v405
        %v1732 = vpop.f32.mrb[0].mxu0
        %v1733 = vadd.f32 %v1572, %v1732
        %v1734 = vpop.f32.mrb[0].mxu0
        %v1735 = vpop.f32.mrb[0].mxu0
        %v1736 = vadd.f32 %v1575, %v1735
        %v1737 = vpop.f32.mrb[0].mxu0
        %1738 = vmatprep.mubr.bf16.mxu0 %v410
        %1739 = vmatmul.mubr.bf16.gmra.mrb[0].mxu0 %v409
        %v1740 = vpop.f32.mrb[0].mxu0
        %v1741 = vadd.f32 %v1580, %v1740
        %v1742 = vpop.f32.mrb[0].mxu0
        %v1743 = vpop.f32.mrb[0].mxu0
        %v1744 = vadd.f32 %v1583, %v1743
        %v1745 = vpop.f32.mrb[0].mxu0
        %1746 = vmatprep.mubr.bf16.mxu0 %v414
        %1747 = vmatmul.mubr.bf16.gmra.mrb[0].mxu0 %v413
        %v1748 = vpop.f32.mrb[0].mxu0
        %v1749 = vadd.f32 %v1588, %v1748
        %v1750 = vpop.f32.mrb[0].mxu0
        %v1751 = vpop.f32.mrb[0].mxu0
        %v1752 = vadd.f32 %v1591, %v1751
        %v1753 = vpop.f32.mrb[0].mxu0
        %1754 = vmatprep.mubr.bf16.mxu0 %v418
        %1755 = vmatmul.mubr.bf16.gmra.mrb[0].mxu0 %v417
        %v1756 = vpop.f32.mrb[0].mxu0
        %v1757 = vadd.f32 %v1596, %v1756
        %v1758 = vpop.f32.mrb[0].mxu0
        %v1759 = vpop.f32.mrb[0].mxu0
        %v1760 = vadd.f32 %v1599, %v1759
        %v1761 = vpop.f32.mrb[0].mxu0
        %1762 = vmatprep.mubr.bf16.mxu0 %v422
        %1763 = vmatmul.mubr.bf16.gmra.mrb[0].mxu0 %v421
        %v1764 = vpop.f32.mrb[0].mxu0
        %v1765 = vadd.f32 %v1604, %v1764
        %v1766 = vpop.f32.mrb[0].mxu0
        %v1767 = vpop.f32.mrb[0].mxu0
        %v1768 = vadd.f32 %v1607, %v1767
        %v1769 = vpop.f32.mrb[0].mxu0
        %1770 = vmatprep.mubr.bf16.mxu0 %v426
        %1771 = vmatmul.mubr.bf16.gmra.mrb[0].mxu0 %v425
        %v1772 = vpop.f32.mrb[0].mxu0
        %v1773 = vadd.f32 %v1612, %v1772
        %v1774 = vpop.f32.mrb[0].mxu0
        %v1775 = vpop.f32.mrb[0].mxu0
        %v1776 = vadd.f32 %v1615, %v1775
        %v1777 = vpop.f32.mrb[0].mxu0
        %1778 = vdwg.mxu0
        %v1779 = vadd.f32 %v1169, %v1653
        %v1780 = vadd.f32 %v1170, %v1656
        %v1781 = vadd.f32 %v1171, %v1661
        %v1782 = vadd.f32 %v1172, %v1664
        %v1783 = vadd.f32 %v1173, %v1669
        %v1784 = vadd.f32 %v1174, %v1672
        %v1785 = vadd.f32 %v1175, %v1677
        %v1786 = vadd.f32 %v1176, %v1680
        %v1787 = vadd.f32 %v1177, %v1685
        %v1788 = vadd.f32 %v1178, %v1688
        %v1789 = vadd.f32 %v1179, %v1693
        %v1790 = vadd.f32 %v1180, %v1696
        %v1791 = vadd.f32 %v1181, %v1701
        %v1792 = vadd.f32 %v1182, %v1704
        %v1793 = vadd.f32 %v1183, %v1709
        %v1794 = vadd.f32 %v1184, %v1712
        %v1795 = vadd.f32 %v1185, %v1717
        %v1796 = vadd.f32 %v1186, %v1720
        %v1797 = vadd.f32 %v1187, %v1725
        %v1798 = vadd.f32 %v1188, %v1728
        %v1799 = vadd.f32 %v1189, %v1733
        %v1800 = vadd.f32 %v1190, %v1736
        %v1801 = vadd.f32 %v1191, %v1741
        %v1802 = vadd.f32 %v1192, %v1744
        %v1803 = vadd.f32 %v1193, %v1749
        %v1804 = vadd.f32 %v1194, %v1752
        %v1805 = vadd.f32 %v1195, %v1757
        %v1806 = vadd.f32 %v1196, %v1760
        %v1807 = vadd.f32 %v1197, %v1765
        %v1808 = vadd.f32 %v1198, %v1768
        %v1809 = vadd.f32 %v1199, %v1773
        %v1810 = vadd.f32 %v1200, %v1776
        %1811 = vst [vmem:[#allocation2] sm:$0xff] %v1779
        %1812 = vst [vmem:[#allocation2 + $0x8] sm:$0xff] %v1780
        %1813 = vst [vmem:[#allocation2 + $0x10] sm:$0xff] %v1781
        %1814 = vst [vmem:[#allocation2 + $0x18] sm:$0xff] %v1782
        %1815 = vst [vmem:[#allocation2 + $0x20] sm:$0xff] %v1783
        %1816 = vst [vmem:[#allocation2 + $0x28] sm:$0xff] %v1784
        %1817 = vst [vmem:[#allocation2 + $0x30] sm:$0xff] %v1785
        %1818 = vst [vmem:[#allocation2 + $0x38] sm:$0xff] %v1786
        %1819 = vst [vmem:[#allocation2 + $0x40] sm:$0xff] %v1787
        %1820 = vst [vmem:[#allocation2 + $0x48] sm:$0xff] %v1788
        %1821 = vst [vmem:[#allocation2 + $0x50] sm:$0xff] %v1789
        %1822 = vst [vmem:[#allocation2 + $0x58] sm:$0xff] %v1790
        %1823 = vst [vmem:[#allocation2 + $0x60] sm:$0xff] %v1791
        %1824 = vst [vmem:[#allocation2 + $0x68] sm:$0xff] %v1792
        %1825 = vst [vmem:[#allocation2 + $0x70] sm:$0xff] %v1793
        %1826 = vst [vmem:[#allocation2 + $0x78] sm:$0xff] %v1794
        %1827 = vst [vmem:[#allocation2 + $0x80] sm:$0xff] %v1795
        %1828 = vst [vmem:[#allocation2 + $0x88] sm:$0xff] %v1796
        %1829 = vst [vmem:[#allocation2 + $0x90] sm:$0xff] %v1797
        %1830 = vst [vmem:[#allocation2 + $0x98] sm:$0xff] %v1798
        %1831 = vst [vmem:[#allocation2 + $0xa0] sm:$0xff] %v1799
        %1832 = vst [vmem:[#allocation2 + $0xa8] sm:$0xff] %v1800
        %1833 = vst [vmem:[#allocation2 + $0xb0] sm:$0xff] %v1801
        %1834 = vst [vmem:[#allocation2 + $0xb8] sm:$0xff] %v1802
        %1835 = vst [vmem:[#allocation2 + $0xc0] sm:$0xff] %v1803
        %1836 = vst [vmem:[#allocation2 + $0xc8] sm:$0xff] %v1804
        %1837 = vst [vmem:[#allocation2 + $0xd0] sm:$0xff] %v1805
        %1838 = vst [vmem:[#allocation2 + $0xd8] sm:$0xff] %v1806
        %1839 = vst [vmem:[#allocation2 + $0xe0] sm:$0xff] %v1807
        %1840 = vst [vmem:[#allocation2 + $0xe8] sm:$0xff] %v1808
        %1841 = vst [vmem:[#allocation2 + $0xf0] sm:$0xff] %v1809
        %1842 = vst [vmem:[#allocation2 + $0xf8] sm:$0xff] %v1810
        %p1843 = scmp.eq.s32.totalorder %s30, 1
        // Predicated region
        $region57: #{tpu_custom_call.1} parent=35 // pred_check
          %p1844 = pneg %p1843
        $region58: #{tpu_custom_call.1} parent=35 // pred_check_branch
          %1846 = sbr.rel (%p1844) target = $region60
        $region59: #{tpu_custom_call.1} parent=35 // pred_region
          %v1847 = vld [vmem:[%s324] sm:$0xff]
          %v1848 = vld [vmem:[%s324 + $0x8] sm:$0xff]
          %v1849 = vld [vmem:[%s324 + $0x10] sm:$0xff]
          %v1850 = vld [vmem:[%s324 + $0x18] sm:$0xff]
          %v1851 = vld [vmem:[%s324 + $0x20] sm:$0xff]
          %v1852 = vld [vmem:[%s324 + $0x28] sm:$0xff]
          %v1853 = vld [vmem:[%s324 + $0x30] sm:$0xff]
          %v1854 = vld [vmem:[%s324 + $0x38] sm:$0xff]
          %v1855 = vld [vmem:[%s324 + $0x40] sm:$0xff]
          %v1856 = vld [vmem:[%s324 + $0x48] sm:$0xff]
          %v1857 = vld [vmem:[%s324 + $0x50] sm:$0xff]
          %v1858 = vld [vmem:[%s324 + $0x58] sm:$0xff]
          %v1859 = vld [vmem:[%s324 + $0x60] sm:$0xff]
          %v1860 = vld [vmem:[%s324 + $0x68] sm:$0xff]
          %v1861 = vld [vmem:[%s324 + $0x70] sm:$0xff]
          %v1862 = vld [vmem:[%s324 + $0x78] sm:$0xff]
          %v1863 = vld [vmem:[%s324 + $0x80] sm:$0xff]
          %v1864 = vld [vmem:[%s324 + $0x88] sm:$0xff]
          %v1865 = vld [vmem:[%s324 + $0x90] sm:$0xff]
          %v1866 = vld [vmem:[%s324 + $0x98] sm:$0xff]
          %v1867 = vld [vmem:[%s324 + $0xa0] sm:$0xff]
          %v1868 = vld [vmem:[%s324 + $0xa8] sm:$0xff]
          %v1869 = vld [vmem:[%s324 + $0xb0] sm:$0xff]
          %v1870 = vld [vmem:[%s324 + $0xb8] sm:$0xff]
          %v1871 = vld [vmem:[%s324 + $0xc0] sm:$0xff]
          %v1872 = vld [vmem:[%s324 + $0xc8] sm:$0xff]
          %v1873 = vld [vmem:[%s324 + $0xd0] sm:$0xff]
          %v1874 = vld [vmem:[%s324 + $0xd8] sm:$0xff]
          %v1875 = vld [vmem:[%s324 + $0xe0] sm:$0xff]
          %v1876 = vld [vmem:[%s324 + $0xe8] sm:$0xff]
          %v1877 = vld [vmem:[%s324 + $0xf0] sm:$0xff]
          %v1878 = vld [vmem:[%s324 + $0xf8] sm:$0xff]
          %v1879 = vld [vmem:[#allocation2] sm:$0xff]
          %v1880 = vld [vmem:[#allocation2 + $0x8] sm:$0xff]
          %v1881 = vld [vmem:[#allocation2 + $0x10] sm:$0xff]
          %v1882 = vld [vmem:[#allocation2 + $0x18] sm:$0xff]
          %v1883 = vld [vmem:[#allocation2 + $0x20] sm:$0xff]
          %v1884 = vld [vmem:[#allocation2 + $0x28] sm:$0xff]
          %v1885 = vld [vmem:[#allocation2 + $0x30] sm:$0xff]
          %v1886 = vld [vmem:[#allocation2 + $0x38] sm:$0xff]
          %v1887 = vld [vmem:[#allocation2 + $0x40] sm:$0xff]
          %v1888 = vld [vmem:[#allocation2 + $0x48] sm:$0xff]
          %v1889 = vld [vmem:[#allocation2 + $0x50] sm:$0xff]
          %v1890 = vld [vmem:[#allocation2 + $0x58] sm:$0xff]
          %v1891 = vld [vmem:[#allocation2 + $0x60] sm:$0xff]
          %v1892 = vld [vmem:[#allocation2 + $0x68] sm:$0xff]
          %v1893 = vld [vmem:[#allocation2 + $0x70] sm:$0xff]
          %v1894 = vld [vmem:[#allocation2 + $0x78] sm:$0xff]
          %v1895 = vld [vmem:[#allocation2 + $0x80] sm:$0xff]
          %v1896 = vld [vmem:[#allocation2 + $0x88] sm:$0xff]
          %v1897 = vld [vmem:[#allocation2 + $0x90] sm:$0xff]
          %v1898 = vld [vmem:[#allocation2 + $0x98] sm:$0xff]
          %v1899 = vld [vmem:[#allocation2 + $0xa0] sm:$0xff]
          %v1900 = vld [vmem:[#allocation2 + $0xa8] sm:$0xff]
          %v1901 = vld [vmem:[#allocation2 + $0xb0] sm:$0xff]
          %v1902 = vld [vmem:[#allocation2 + $0xb8] sm:$0xff]
          %v1903 = vld [vmem:[#allocation2 + $0xc0] sm:$0xff]
          %v1904 = vld [vmem:[#allocation2 + $0xc8] sm:$0xff]
          %v1905 = vld [vmem:[#allocation2 + $0xd0] sm:$0xff]
          %v1906 = vld [vmem:[#allocation2 + $0xd8] sm:$0xff]
          %v1907 = vld [vmem:[#allocation2 + $0xe0] sm:$0xff]
          %v1908 = vld [vmem:[#allocation2 + $0xe8] sm:$0xff]
          %v1909 = vld [vmem:[#allocation2 + $0xf0] sm:$0xff]
          %v1910 = vld [vmem:[#allocation2 + $0xf8] sm:$0xff]
          %v1911 = vpack.c.bf16 %v1880, %v1879
          %v1912 = vpack.c.bf16 %v1882, %v1881
          %v1913 = vpack.c.bf16 %v1884, %v1883
          %v1914 = vpack.c.bf16 %v1886, %v1885
          %v1915 = vpack.c.bf16 %v1888, %v1887
          %v1916 = vpack.c.bf16 %v1890, %v1889
          %v1917 = vpack.c.bf16 %v1892, %v1891
          %v1918 = vpack.c.bf16 %v1894, %v1893
          %v1919 = vpack.c.bf16 %v1896, %v1895
          %v1920 = vpack.c.bf16 %v1898, %v1897
          %v1921 = vpack.c.bf16 %v1900, %v1899
          %v1922 = vpack.c.bf16 %v1902, %v1901
          %v1923 = vpack.c.bf16 %v1904, %v1903
          %v1924 = vpack.c.bf16 %v1906, %v1905
          %v1925 = vpack.c.bf16 %v1908, %v1907
          %v1926 = vpack.c.bf16 %v1910, %v1909
          %v1927 = vld [vmem:[#allocation9] sm:$0xf]
          %v1928 = vld [vmem:[#allocation9 + $0x4] sm:$0xf]
          %v1929 = vld [vmem:[#allocation9 + $0x8] sm:$0xf]
          %v1930 = vld [vmem:[#allocation9 + $0xc] sm:$0xf]
          %v1931 = vld [vmem:[#allocation9 + $0x10] sm:$0xf]
          %v1932 = vld [vmem:[#allocation9 + $0x14] sm:$0xf]
          %v1933 = vld [vmem:[#allocation9 + $0x18] sm:$0xf]
          %v1934 = vld [vmem:[#allocation9 + $0x1c] sm:$0xf]
          %v1935 = vld [vmem:[#allocation9 + $0x20] sm:$0xf]
          %v1936 = vld [vmem:[#allocation9 + $0x24] sm:$0xf]
          %v1937 = vld [vmem:[#allocation9 + $0x28] sm:$0xf]
          %v1938 = vld [vmem:[#allocation9 + $0x2c] sm:$0xf]
          %v1939 = vld [vmem:[#allocation9 + $0x30] sm:$0xf]
          %v1940 = vld [vmem:[#allocation9 + $0x34] sm:$0xf]
          %v1941 = vld [vmem:[#allocation9 + $0x38] sm:$0xf]
          %v1942 = vld [vmem:[#allocation9 + $0x3c] sm:$0xf]
          %v1959 = vunpack.c.l.b16 %v1927
          %v1960 = vunpack.c.l.b16 %v1928
          %v1961 = vunpack.c.l.b16 %v1929
          %v1962 = vunpack.c.l.b16 %v1930
          %v1963 = vunpack.c.l.b16 %v1931
          %v1964 = vunpack.c.l.b16 %v1932
          %v1965 = vunpack.c.l.b16 %v1933
          %v1966 = vunpack.c.l.b16 %v1934
          %v1967 = vunpack.c.l.b16 %v1935
          %v1968 = vunpack.c.l.b16 %v1936
          %v1969 = vunpack.c.l.b16 %v1937
          %v1970 = vunpack.c.l.b16 %v1938
          %v1971 = vunpack.c.l.b16 %v1939
          %v1972 = vunpack.c.l.b16 %v1940
          %v1973 = vunpack.c.l.b16 %v1941
          %v1974 = vunpack.c.l.b16 %v1942
          %v1975 = vpack.c.b16 %v1960, %v1959
          %v1976 = vpack.c.b16 %v1962, %v1961
          %v1977 = vpack.c.b16 %v1964, %v1963
          %v1978 = vpack.c.b16 %v1966, %v1965
          %v1979 = vpack.c.b16 %v1968, %v1967
          %v1980 = vpack.c.b16 %v1970, %v1969
          %v1981 = vpack.c.b16 %v1972, %v1971
          %v1982 = vpack.c.b16 %v1974, %v1973
          %1991 = vmatprep.subr.bf16.mxu0 0
          %1992 = vmatpush1.bf16.msra.mxu0 %v1975
          %1993 = vmatprep.subr.bf16.mxu0 0
          %1994 = vmatpush1.bf16.msra.mxu0 %v1976
          %1995 = vmatprep.subr.bf16.mxu0 0
          %1996 = vmatpush1.bf16.msra.mxu0 %v1977
          %1997 = vmatprep.subr.bf16.mxu0 0
          %1998 = vmatpush1.bf16.msra.mxu0 %v1978
          %1999 = vmatprep.subr.bf16.mxu0 0
          %2000 = vmatpush1.bf16.msra.mxu0 %v1979
          %2001 = vmatprep.subr.bf16.mxu0 0
          %2002 = vmatpush1.bf16.msra.mxu0 %v1980
          %2003 = vmatprep.subr.bf16.mxu0 0
          %2004 = vmatpush1.bf16.msra.mxu0 %v1981
          %2005 = vmatprep.subr.bf16.mxu0 0
          %2006 = vmatpush1.bf16.msra.mxu0 %v1982
          %2007 = vmatprep.subr.bf16.mxu0 0
          %2008 = vmatpush1.bf16.msra.mxu0 0
          %2009 = vmatprep.subr.bf16.mxu0 0
          %2010 = vmatpush1.bf16.msra.mxu0 0
          %2011 = vmatprep.subr.bf16.mxu0 0
          %2012 = vmatpush1.bf16.msra.mxu0 0
          %2013 = vmatprep.subr.bf16.mxu0 0
          %2014 = vmatpush1.bf16.msra.mxu0 0
          %2015 = vmatprep.subr.bf16.mxu0 0
          %2016 = vmatpush1.bf16.msra.mxu0 0
          %2017 = vmatprep.subr.bf16.mxu0 0
          %2018 = vmatpush1.bf16.msra.mxu0 0
          %2019 = vmatprep.subr.bf16.mxu0 0
          %2020 = vmatpush1.bf16.msra.mxu0 0
          %2021 = vmatprep.subr.bf16.mxu0 0
          %2022 = vmatpush1.bf16.msra.mxu0 0
          %2023 = vmatprep.mubr.bf16.mxu0 0
          %2024 = vmatmul.mubr.bf16.gmra.mrb[0].mxu0 %v1911
          %v2025 = vpop.f32.mrb[0].mxu0
          %v2026 = vadd.f32 0.0, %v2025
          %v2027 = vpop.f32.mrb[0].mxu0
          %v2028 = vpop.f32.mrb[0].mxu0
          %v2029 = vadd.f32 0.0, %v2028
          %v2030 = vpop.f32.mrb[0].mxu0
          %2031 = vmatprep.mubr.bf16.mxu0 0
          %2032 = vmatmul.mubr.bf16.gmra.mrb[0].mxu0 %v1912
          %v2033 = vpop.f32.mrb[0].mxu0
          %v2034 = vadd.f32 0.0, %v2033
          %v2035 = vpop.f32.mrb[0].mxu0
          %v2036 = vpop.f32.mrb[0].mxu0
          %v2037 = vadd.f32 0.0, %v2036
          %v2038 = vpop.f32.mrb[0].mxu0
          %2039 = vmatprep.mubr.bf16.mxu0 0
          %2040 = vmatmul.mubr.bf16.gmra.mrb[0].mxu0 %v1913
          %v2041 = vpop.f32.mrb[0].mxu0
          %v2042 = vadd.f32 0.0, %v2041
          %v2043 = vpop.f32.mrb[0].mxu0
          %v2044 = vpop.f32.mrb[0].mxu0
          %v2045 = vadd.f32 0.0, %v2044
          %v2046 = vpop.f32.mrb[0].mxu0
          %2047 = vmatprep.mubr.bf16.mxu0 0
          %2048 = vmatmul.mubr.bf16.gmra.mrb[0].mxu0 %v1914
          %v2049 = vpop.f32.mrb[0].mxu0
          %v2050 = vadd.f32 0.0, %v2049
          %v2051 = vpop.f32.mrb[0].mxu0
          %v2052 = vpop.f32.mrb[0].mxu0
          %v2053 = vadd.f32 0.0, %v2052
          %v2054 = vpop.f32.mrb[0].mxu0
          %2055 = vmatprep.mubr.bf16.mxu0 0
          %2056 = vmatmul.mubr.bf16.gmra.mrb[0].mxu0 %v1915
          %v2057 = vpop.f32.mrb[0].mxu0
          %v2058 = vadd.f32 0.0, %v2057
          %v2059 = vpop.f32.mrb[0].mxu0
          %v2060 = vpop.f32.mrb[0].mxu0
          %v2061 = vadd.f32 0.0, %v2060
          %v2062 = vpop.f32.mrb[0].mxu0
          %2063 = vmatprep.mubr.bf16.mxu0 0
          %2064 = vmatmul.mubr.bf16.gmra.mrb[0].mxu0 %v1916
          %v2065 = vpop.f32.mrb[0].mxu0
          %v2066 = vadd.f32 0.0, %v2065
          %v2067 = vpop.f32.mrb[0].mxu0
          %v2068 = vpop.f32.mrb[0].mxu0
          %v2069 = vadd.f32 0.0, %v2068
          %v2070 = vpop.f32.mrb[0].mxu0
          %2071 = vmatprep.mubr.bf16.mxu0 0
          %2072 = vmatmul.mubr.bf16.gmra.mrb[0].mxu0 %v1917
          %v2073 = vpop.f32.mrb[0].mxu0
          %v2074 = vadd.f32 0.0, %v2073
          %v2075 = vpop.f32.mrb[0].mxu0
          %v2076 = vpop.f32.mrb[0].mxu0
          %v2077 = vadd.f32 0.0, %v2076
          %v2078 = vpop.f32.mrb[0].mxu0
          %2079 = vmatprep.mubr.bf16.mxu0 0
          %2080 = vmatmul.mubr.bf16.gmra.mrb[0].mxu0 %v1918
          %v2081 = vpop.f32.mrb[0].mxu0
          %v2082 = vadd.f32 0.0, %v2081
          %v2083 = vpop.f32.mrb[0].mxu0
          %v2084 = vpop.f32.mrb[0].mxu0
          %v2085 = vadd.f32 0.0, %v2084
          %v2086 = vpop.f32.mrb[0].mxu0
          %2087 = vmatprep.mubr.bf16.mxu0 0
          %2088 = vmatmul.mubr.bf16.gmra.mrb[0].mxu0 %v1919
          %v2089 = vpop.f32.mrb[0].mxu0
          %v2090 = vadd.f32 0.0, %v2089
          %v2091 = vpop.f32.mrb[0].mxu0
          %v2092 = vpop.f32.mrb[0].mxu0
          %v2093 = vadd.f32 0.0, %v2092
          %v2094 = vpop.f32.mrb[0].mxu0
          %2095 = vmatprep.mubr.bf16.mxu0 0
          %2096 = vmatmul.mubr.bf16.gmra.mrb[0].mxu0 %v1920
          %v2097 = vpop.f32.mrb[0].mxu0
          %v2098 = vadd.f32 0.0, %v2097
          %v2099 = vpop.f32.mrb[0].mxu0
          %v2100 = vpop.f32.mrb[0].mxu0
          %v2101 = vadd.f32 0.0, %v2100
          %v2102 = vpop.f32.mrb[0].mxu0
          %2103 = vmatprep.mubr.bf16.mxu0 0
          %2104 = vmatmul.mubr.bf16.gmra.mrb[0].mxu0 %v1921
          %v2105 = vpop.f32.mrb[0].mxu0
          %v2106 = vadd.f32 0.0, %v2105
          %v2107 = vpop.f32.mrb[0].mxu0
          %v2108 = vpop.f32.mrb[0].mxu0
          %v2109 = vadd.f32 0.0, %v2108
          %v2110 = vpop.f32.mrb[0].mxu0
          %2111 = vmatprep.mubr.bf16.mxu0 0
          %2112 = vmatmul.mubr.bf16.gmra.mrb[0].mxu0 %v1922
          %v2113 = vpop.f32.mrb[0].mxu0
          %v2114 = vadd.f32 0.0, %v2113
          %v2115 = vpop.f32.mrb[0].mxu0
          %v2116 = vpop.f32.mrb[0].mxu0
          %v2117 = vadd.f32 0.0, %v2116
          %v2118 = vpop.f32.mrb[0].mxu0
          %2119 = vmatprep.mubr.bf16.mxu0 0
          %2120 = vmatmul.mubr.bf16.gmra.mrb[0].mxu0 %v1923
          %v2121 = vpop.f32.mrb[0].mxu0
          %v2122 = vadd.f32 0.0, %v2121
          %v2123 = vpop.f32.mrb[0].mxu0
          %v2124 = vpop.f32.mrb[0].mxu0
          %v2125 = vadd.f32 0.0, %v2124
          %v2126 = vpop.f32.mrb[0].mxu0
          %2127 = vmatprep.mubr.bf16.mxu0 0
          %2128 = vmatmul.mubr.bf16.gmra.mrb[0].mxu0 %v1924
          %v2129 = vpop.f32.mrb[0].mxu0
          %v2130 = vadd.f32 0.0, %v2129
          %v2131 = vpop.f32.mrb[0].mxu0
          %v2132 = vpop.f32.mrb[0].mxu0
          %v2133 = vadd.f32 0.0, %v2132
          %v2134 = vpop.f32.mrb[0].mxu0
          %2135 = vmatprep.mubr.bf16.mxu0 0
          %2136 = vmatmul.mubr.bf16.gmra.mrb[0].mxu0 %v1925
          %v2137 = vpop.f32.mrb[0].mxu0
          %v2138 = vadd.f32 0.0, %v2137
          %v2139 = vpop.f32.mrb[0].mxu0
          %v2140 = vpop.f32.mrb[0].mxu0
          %v2141 = vadd.f32 0.0, %v2140
          %v2142 = vpop.f32.mrb[0].mxu0
          %2143 = vmatprep.mubr.bf16.mxu0 0
          %2144 = vmatmul.mubr.bf16.gmra.mrb[0].mxu0 %v1926
          %v2145 = vpop.f32.mrb[0].mxu0
          %v2146 = vadd.f32 0.0, %v2145
          %v2147 = vpop.f32.mrb[0].mxu0
          %v2148 = vpop.f32.mrb[0].mxu0
          %v2149 = vadd.f32 0.0, %v2148
          %v2150 = vpop.f32.mrb[0].mxu0
          %2151 = vdwg.mxu0
          %v2152 = vadd.f32 %v1847, %v2026
          %v2153 = vadd.f32 %v1848, %v2029
          %v2154 = vadd.f32 %v1849, %v2034
          %v2155 = vadd.f32 %v1850, %v2037
          %v2156 = vadd.f32 %v1851, %v2042
          %v2157 = vadd.f32 %v1852, %v2045
          %v2158 = vadd.f32 %v1853, %v2050
          %v2159 = vadd.f32 %v1854, %v2053
          %v2160 = vadd.f32 %v1855, %v2058
          %v2161 = vadd.f32 %v1856, %v2061
          %v2162 = vadd.f32 %v1857, %v2066
          %v2163 = vadd.f32 %v1858, %v2069
          %v2164 = vadd.f32 %v1859, %v2074
          %v2165 = vadd.f32 %v1860, %v2077
          %v2166 = vadd.f32 %v1861, %v2082
          %v2167 = vadd.f32 %v1862, %v2085
          %v2168 = vadd.f32 %v1863, %v2090
          %v2169 = vadd.f32 %v1864, %v2093
          %v2170 = vadd.f32 %v1865, %v2098
          %v2171 = vadd.f32 %v1866, %v2101
          %v2172 = vadd.f32 %v1867, %v2106
          %v2173 = vadd.f32 %v1868, %v2109
          %v2174 = vadd.f32 %v1869, %v2114
          %v2175 = vadd.f32 %v1870, %v2117
          %v2176 = vadd.f32 %v1871, %v2122
          %v2177 = vadd.f32 %v1872, %v2125
          %v2178 = vadd.f32 %v1873, %v2130
          %v2179 = vadd.f32 %v1874, %v2133
          %v2180 = vadd.f32 %v1875, %v2138
          %v2181 = vadd.f32 %v1876, %v2141
          %v2182 = vadd.f32 %v1877, %v2146
          %v2183 = vadd.f32 %v1878, %v2149
          %2184 = vst [vmem:[%s324] sm:$0xff] %v2152
          %2185 = vst [vmem:[%s324 + $0x8] sm:$0xff] %v2153
          %2186 = vst [vmem:[%s324 + $0x10] sm:$0xff] %v2154
          %2187 = vst [vmem:[%s324 + $0x18] sm:$0xff] %v2155
          %2188 = vst [vmem:[%s324 + $0x20] sm:$0xff] %v2156
          %2189 = vst [vmem:[%s324 + $0x28] sm:$0xff] %v2157
          %2190 = vst [vmem:[%s324 + $0x30] sm:$0xff] %v2158
          %2191 = vst [vmem:[%s324 + $0x38] sm:$0xff] %v2159
          %2192 = vst [vmem:[%s324 + $0x40] sm:$0xff] %v2160
          %2193 = vst [vmem:[%s324 + $0x48] sm:$0xff] %v2161
          %2194 = vst [vmem:[%s324 + $0x50] sm:$0xff] %v2162
          %2195 = vst [vmem:[%s324 + $0x58] sm:$0xff] %v2163
          %2196 = vst [vmem:[%s324 + $0x60] sm:$0xff] %v2164
          %2197 = vst [vmem:[%s324 + $0x68] sm:$0xff] %v2165
          %2198 = vst [vmem:[%s324 + $0x70] sm:$0xff] %v2166
          %2199 = vst [vmem:[%s324 + $0x78] sm:$0xff] %v2167
          %2200 = vst [vmem:[%s324 + $0x80] sm:$0xff] %v2168
          %2201 = vst [vmem:[%s324 + $0x88] sm:$0xff] %v2169
          %2202 = vst [vmem:[%s324 + $0x90] sm:$0xff] %v2170
          %2203 = vst [vmem:[%s324 + $0x98] sm:$0xff] %v2171
          %2204 = vst [vmem:[%s324 + $0xa0] sm:$0xff] %v2172
          %2205 = vst [vmem:[%s324 + $0xa8] sm:$0xff] %v2173
          %2206 = vst [vmem:[%s324 + $0xb0] sm:$0xff] %v2174
          %2207 = vst [vmem:[%s324 + $0xb8] sm:$0xff] %v2175
          %2208 = vst [vmem:[%s324 + $0xc0] sm:$0xff] %v2176
          %2209 = vst [vmem:[%s324 + $0xc8] sm:$0xff] %v2177
          %2210 = vst [vmem:[%s324 + $0xd0] sm:$0xff] %v2178
          %2211 = vst [vmem:[%s324 + $0xd8] sm:$0xff] %v2179
          %2212 = vst [vmem:[%s324 + $0xe0] sm:$0xff] %v2180
          %2213 = vst [vmem:[%s324 + $0xe8] sm:$0xff] %v2181
          %2214 = vst [vmem:[%s324 + $0xf0] sm:$0xff] %v2182
          %2215 = vst [vmem:[%s324 + $0xf8] sm:$0xff] %v2183
        $region60: #{tpu_custom_call.1} parent=35 // pred_fallthru
          _
        %s2216 = sand.u32 %s146, 1
        %s2217 = scalar_lea.sflag [#allocation5], %s2216
        %s2218 = sand.u32 %s146, 1
        %s2219 = smul.addr %s2218, 256
        %s2220 = scalar_lea.vmem [#allocation11], %s2219
        // Predicated region
        $region61: #{tpu_custom_call.1} parent=35 // pred_check
          %p2221 = pneg %p156
        $region62: #{tpu_custom_call.1} parent=35 // pred_check_branch
          %2223 = sbr.rel (%p2221) target = $region64
        $region63: #{tpu_custom_call.1} parent=35 // pred_region
          %s2224 = smul.u32 32, %s29
          %s2226 = ssub.s32 4096, 4096
          %2227 = vsyncadd %s2217, %s2226
          %s2228 = smul.addr %s2224, 128
          %s2229 = scalar_lea.hbm %s4, %s2228
          %s2230 = sshll.u32 %s2220, 4
          %s2231 = int_to_ptr.vmem [resolvable:$true] %s2230
          %2236 = dma.vmem_to_hbm [thread:$0]  %s2231, 4096, %s2229, %s2217, 128, 128, 8
        $region64: #{tpu_custom_call.1} parent=35 // pred_fallthru
          _
      $region36: #{tpu_custom_call.1} parent=5 // pred_fallthru
        _
      %p2237 = scmp.le.s32.totalorder 2, %s20
      // Predicated region
      $region65: #{tpu_custom_call.1} parent=5 // pred_check
        %p2238 = pneg %p2237
      $region66: #{tpu_custom_call.1} parent=5 // pred_check_branch
        %2240 = sbr.rel (%p2238) target = $region68
      $region67: #{tpu_custom_call.1} parent=5 // pred_region
        %s2241 = ssub.s32 %s20, 2
        // Predicated region
        $region69: #{tpu_custom_call.1} parent=67 // pred_check
          %p2242 = pneg %p162
        $region70: #{tpu_custom_call.1} parent=67 // pred_check_branch
          %2244 = sbr.rel (%p2242) target = $region72
        $region71: #{tpu_custom_call.1} parent=67 // pred_region
          %s2245 = sand.u32 %s147, 1
          %s2246 = scalar_lea.sflag [#allocation5], %s2245
          %s2247 = sand.u32 %s147, 1
          %s2248 = smul.addr %s2247, 256
          %s2249 = scalar_lea.vmem [#allocation11], %s2248
          %2250 = dma.done %s2246, 4096
        $region72: #{tpu_custom_call.1} parent=67 // pred_fallthru
          _
      $region68: #{tpu_custom_call.1} parent=5 // pred_fallthru
        _
    $region6: #{tpu_custom_call.1} parent=1 // loop_footer
      %s24 = sadd.s32 1, %s20
    $region7: #{tpu_custom_call.1} parent=1 // loop_footer_branch
      %19 = sbr.rel target = $region3
    $region8: #{tpu_custom_call.1} parent=1 // loop_exit
      _
    %2251 = vsyncpa [#allocation4], 1
    %s2252 = scalar_lea.sflag [#allocation4], 1
    %2253 = vsyncpa %s2252, 1
    %2254 = vsyncpa [#allocation7], 1
    %s2255 = scalar_lea.sflag [#allocation7], 1
    %2256 = vsyncpa %s2255, 1
    %2257 = vsyncpa [#allocation10], 1
    %2258 = vsyncpa [#allocation5], 1
    %s2259 = scalar_lea.sflag [#allocation5], 1
    %2260 = vsyncpa %s2259, 1

</llo_original>
